<compile_context>
chip_gen: v5e
topology: v5e:2x2
jax: 0.10.0
libtpu: 0.0.40
codegen_flags: <defaults>
</compile_context>

<pallas_src>
import functools

import jax
import jax.numpy as jnp
from jax.experimental import pallas as pl
from jax.experimental.pallas import tpu as pltpu

MATMUL_DTYPE = jnp.bfloat16   # jnp.float32 => closest numeric parity with torch


# ------------------------------ in-kernel helpers ---------------------------

def _ln(x, g, b):
    # torch nn.LayerNorm default: eps=1e-5, affine
    mean = jnp.mean(x, axis=-1, keepdims=True)
    xc = x - mean
    var = jnp.mean(xc * xc, axis=-1, keepdims=True)
    return xc * jax.lax.rsqrt(var + 1e-5) * g + b


def _gelu(x):
    # tanh-approx GELU (tanh lowers to the EUP slot); |err| vs exact-erf GELU
    # < 1e-3 absolute -- documented tolerance vs torch.nn.GELU().
    c = 0.7978845608028654  # sqrt(2/pi)
    return 0.5 * x * (1.0 + jnp.tanh(c * (x + 0.044715 * x * x * x)))


# ------------------------------ fused ViT kernel ----------------------------

def _vit_kernel(patches_ref, pe_ref, pw_ref, pb_ref,
                ln4_ref, w1s_ref, w2s_ref, wouth_ref,
                fw1_ref, fw2_ref, fw3_ref, fw4_ref, fb_ref,
                hln_ref, hw_ref, hb_ref,
                out_ref, x_sc):
    """Grid = (batch, depth). One grid step = one transformer layer of one image.

    x_sc (VMEM scratch) carries the (N, D) activation across the depth loop.
    d == 0 additionally does patch-embed + pos-emb; d == depth-1 additionally
    does the final LayerNorm + classifier head on the first token.
    """
    d = pl.program_id(1)
    last = pl.num_programs(1) - 1

    # ---- patch embedding + positional embedding (first layer step only) ----
    @pl.when(d == 0)
    def _():
        x_sc[...] = (jnp.dot(patches_ref[...].astype(pw_ref.dtype), pw_ref[...],
                             preferred_element_type=jnp.float32)
                     + pb_ref[...] + pe_ref[...])

    x = x_sc[...]                               # (N, D) f32 residual stream
    N, D = x.shape
    w2 = w2s_ref[...]                           # (3H, ra, dh)
    H = w2.shape[0] // 3
    ra, dh = w2.shape[1], w2.shape[2]
    cdt = w2.dtype
    ln = ln4_ref[...]                           # (4, D): attn_g, attn_b, ff_g, ff_b

    # ---------------- attention (pre-LN, factorized QKV, residual) ----------
    h = _ln(x, ln[0:1, :], ln[1:2, :]).astype(cdt)
    # stage 1: batched over {q,k,v}; attention scale folded into q slice at init
    low3 = jnp.einsum('cnd,cdr->cnr', jnp.broadcast_to(h, (3, N, D)),
                      w1s_ref[...], preferred_element_type=jnp.float32)  # (3,N,ra)
    # stage 2: batched over heads -> (H, N, dh) directly (no transposes, no
    # misaligned lane slices).
    lq = jnp.broadcast_to(low3[0:1].astype(cdt), (H, N, ra))
    lk = jnp.broadcast_to(low3[1:2].astype(cdt), (H, N, ra))
    lv = jnp.broadcast_to(low3[2:3].astype(cdt), (H, N, ra))
    q = jnp.einsum('hnr,hrd->hnd', lq, w2[0:H], preferred_element_type=jnp.float32)
    k = jnp.einsum('hnr,hrd->hnd', lk, w2[H:2 * H], preferred_element_type=jnp.float32)
    v = jnp.einsum('hnr,hrd->hnd', lv, w2[2 * H:3 * H], preferred_element_type=jnp.float32)

    s = jnp.einsum('hqd,hkd->hqk', q.astype(cdt), k.astype(cdt),
                   preferred_element_type=jnp.float32)            # (H, N, N)
    s = s - jnp.max(s, axis=-1, keepdims=True)
    p = jnp.exp(s)
    p = p * pl.reciprocal(jnp.sum(p, axis=-1, keepdims=True), approx=True)
    o = jnp.einsum('hqk,hkd->hqd', p.astype(cdt), v.astype(cdt),
                   preferred_element_type=jnp.float32)            # (H, N, dh)
    # per-head slices of the out-projection, summed over heads
    ah = jnp.einsum('hnd,hde->hne', o.astype(cdt), wouth_ref[...],
                    preferred_element_type=jnp.float32)           # (H, N, D)
    y = x + jnp.sum(ah, axis=0)                                   # residual 1

    # ---------------- feedforward (pre-LN, factorized MLP, residual) --------
    fb = fb_ref[...]                                              # (4, maxbw) f32
    rf = fw1_ref.shape[-1]
    mlp = fw2_ref.shape[-1]
    f = _ln(y, ln[2:3, :], ln[3:4, :]).astype(cdt)
    f = jnp.dot(f, fw1_ref[...], preferred_element_type=jnp.float32) + fb[0:1, :rf]
    f = jnp.dot(f.astype(cdt), fw2_ref[...], preferred_element_type=jnp.float32) + fb[1:2, :mlp]
    f = _gelu(f)
    f = jnp.dot(f.astype(cdt), fw3_ref[...], preferred_element_type=jnp.float32) + fb[2:3, :rf]
    f = jnp.dot(f.astype(cdt), fw4_ref[...], preferred_element_type=jnp.float32) + fb[3:4, :D]
    xn = y + f                                                    # residual 2
    x_sc[...] = xn

    # ---- final LayerNorm + classifier head on token 0 (last layer only) ----
    @pl.when(d == last)
    def _():
        hln = hln_ref[...]                                        # (2, D)
        pooled = _ln(xn[0:1, :], hln[0:1, :], hln[1:2, :]).astype(cdt)
        out_ref[...] = (jnp.dot(pooled, hw_ref[...],
                                preferred_element_type=jnp.float32) + hb_ref[...])


# ------------------------------ wrapper --------------------------------------

def posemb_sincos_2d(h, w, dim, temperature=10000.0):
    assert dim % 4 == 0, 'feature dimension must be multiple of 4'
    y, x = jnp.meshgrid(jnp.arange(h, dtype=jnp.float32),
                        jnp.arange(w, dtype=jnp.float32), indexing='ij')
    omega = jnp.arange(dim // 4, dtype=jnp.float32) / (dim // 4 - 1)
    omega = 1.0 / (temperature ** omega)
    y = y.flatten()[:, None] * omega[None, :]
    x = x.flatten()[:, None] * omega[None, :]
    return jnp.concatenate((jnp.sin(x), jnp.cos(x), jnp.sin(y), jnp.cos(y)),
                           axis=1).astype(jnp.float32)


def vit_factorized_forward(img, params, cfg):
    B, C, H, W = img.shape
    ph, pw = cfg['patch']
    dim, heads, dh = cfg['dim'], cfg['heads'], cfg['dim_head']
    depth, ncls = cfg['depth'], cfg['num_classes']
    gh, gw = H // ph, W // pw
    N = gh * gw
    Pd = ph * pw * C

    # 'b c (h p1) (w p2) -> b (h w) (p1 p2 c)'
    x = img.reshape(B, C, gh, ph, gw, pw)
    x = jnp.transpose(x, (0, 2, 4, 3, 5, 1)).reshape(B, N, Pd)
    pe = posemb_sincos_2d(gh, gw, dim)                  # (N, dim), shared over batch

    ra = params['w1s'].shape[-1]
    rf = params['fw1'].shape[-1]
    mlp = params['fw2'].shape[-1]
    maxbw = params['fb'].shape[-1]

    logits = pl.pallas_call(
        _vit_kernel,
        out_shape=jax.ShapeDtypeStruct((B, 1, ncls), jnp.float32),
        grid=(B, depth),
        in_specs=[
            pl.BlockSpec((None, N, Pd), lambda b, d: (b, 0, 0)),             # patches
            pl.BlockSpec((N, dim), lambda b, d: (0, 0)),                     # pos emb
            pl.BlockSpec((Pd, dim), lambda b, d: (0, 0)),                    # patch W^T
            pl.BlockSpec((1, dim), lambda b, d: (0, 0)),                     # patch bias
            pl.BlockSpec((None, 4, dim), lambda b, d: (d, 0, 0)),            # LN params
            pl.BlockSpec((None, 3, dim, ra), lambda b, d: (d, 0, 0, 0)),     # qkv stage-1
            pl.BlockSpec((None, 3 * heads, ra, dh), lambda b, d: (d, 0, 0, 0)),  # qkv stage-2
            pl.BlockSpec((None, heads, dh, dim), lambda b, d: (d, 0, 0, 0)),     # out proj
            pl.BlockSpec((None, dim, rf), lambda b, d: (d, 0, 0)),           # ffn w1
            pl.BlockSpec((None, rf, mlp), lambda b, d: (d, 0, 0)),           # ffn w2
            pl.BlockSpec((None, mlp, rf), lambda b, d: (d, 0, 0)),           # ffn w3
            pl.BlockSpec((None, rf, dim), lambda b, d: (d, 0, 0)),           # ffn w4
            pl.BlockSpec((None, 4, maxbw), lambda b, d: (d, 0, 0)),          # ffn biases
            pl.BlockSpec((2, dim), lambda b, d: (0, 0)),                     # head LN
            pl.BlockSpec((dim, ncls), lambda b, d: (0, 0)),                  # head W^T
            pl.BlockSpec((1, ncls), lambda b, d: (0, 0)),                    # head bias
        ],
        out_specs=pl.BlockSpec((None, 1, ncls), lambda b, d: (b, 0, 0)),
        scratch_shapes=[pltpu.VMEM((N, dim), jnp.float32)],
        compiler_params=pltpu.CompilerParams(
            dimension_semantics=("parallel", "arbitrary"),
            vmem_limit_bytes=32 * 1024 * 1024),
    )(x, pe, params['patch_wT'], params['patch_b'],
      params['ln4'], params['w1s'], params['w2s'], params['wouth'],
      params['fw1'], params['fw2'], params['fw3'], params['fw4'], params['fb'],
      params['head_ln'], params['head_wT'], params['head_b'])
    return logits.reshape(B, ncls)


# ------------------------------ parameter init -------------------------------

def init_params(key, cfg):
    C = cfg['channels']
    ph, pw = cfg['patch']
    dim, heads, dh = cfg['dim'], cfg['heads'], cfg['dim_head']
    inner = heads * dh
    mlp, depth = cfg['mlp_dim'], cfg['depth']
    rs_attn, rs_ff = cfg['rs_attn'], cfg['rs_ff']
    ncls = cfg['num_classes']
    patch_dim = C * ph * pw
    ra_m, rf_m = max(rs_attn), max(rs_ff)        # zero-pad ragged ranks to max
    maxbw = max(rf_m, mlp, dim)
    scale = dh ** -0.5
    cdt = MATMUL_DTYPE

    keys = iter(jax.random.split(key, 256))

    def w(shape):   # PyTorch (out, in) layout; transposed / repacked below
        return (0.02 * jax.random.normal(next(keys), shape)).astype(jnp.float32)

    ones = lambda s: jnp.ones(s, jnp.float32)
    zeros = lambda s: jnp.zeros(s, jnp.float32)

    ln4, w1s, w2s, wouth = [], [], [], []
    fw1, fw2, fw3, fw4, fbias = [], [], [], [], []
    for l in range(depth):
        ra, rf = rs_attn[l], rs_ff[l]
        # factorized attention (bias-free, like the reference)
        q1, k1, v1 = w((ra, dim)), w((ra, dim)), w((ra, dim))        # (r, dim)
        q2, k2, v2 = w((inner, ra)), w((inner, ra)), w((inner, ra))  # (inner, r)
        wo = w((dim, inner))                                         # (dim, inner)

        def s1(m, sc=1.0):          # (r, dim) -> (dim, ra_m), zero-padded
            return jnp.pad((m * sc).T, ((0, 0), (0, ra_m - ra)))

        def s2(m):                  # (inner, r) -> per-head (heads, ra_m, dh)
            mt = jnp.pad(m.T, ((0, ra_m - ra), (0, 0)))              # (ra_m, inner)
            return mt.reshape(ra_m, heads, dh).transpose(1, 0, 2)

        w1s.append(jnp.stack([s1(q1, scale), s1(k1), s1(v1)]))       # (3, dim, ra_m)
        w2s.append(jnp.concatenate([s2(q2), s2(k2), s2(v2)], 0))     # (3H, ra_m, dh)
        wouth.append(wo.T.reshape(heads, dh, dim))                   # (H, dh, dim)

        # factorized feedforward (with biases)
        fa, ba = w((rf, dim)), w((rf,))
        fbm, bb = w((mlp, rf)), w((mlp,))
        fc, bc = w((rf, mlp)), w((rf,))
        fd, bd = w((dim, rf)), w((dim,))
        fw1.append(jnp.pad(fa.T, ((0, 0), (0, rf_m - rf))))          # (dim, rf_m)
        fw2.append(jnp.pad(fbm.T, ((0, rf_m - rf), (0, 0))))         # (rf_m, mlp)
        fw3.append(jnp.pad(fc.T, ((0, 0), (0, rf_m - rf))))          # (mlp, rf_m)
        fw4.append(jnp.pad(fd.T, ((0, rf_m - rf), (0, 0))))          # (rf_m, dim)
        padb = lambda b_: jnp.pad(b_, (0, maxbw - b_.shape[0]))
        fbias.append(jnp.stack([padb(jnp.pad(ba, (0, rf_m - rf))), padb(bb),
                                padb(jnp.pad(bc, (0, rf_m - rf))), padb(bd)]))

        ln4.append(jnp.stack([ones((dim,)), zeros((dim,)),
                              ones((dim,)), zeros((dim,))]))          # (4, dim)

    params = {
        'patch_wT': w((dim, patch_dim)).T.astype(cdt),                # (patch_dim, dim)
        'patch_b': w((1, dim)),
        'ln4': jnp.stack(ln4),                                        # (depth, 4, dim)
        'w1s': jnp.stack(w1s).astype(cdt),                            # (depth, 3, dim, ra_m)
        'w2s': jnp.stack(w2s).astype(cdt),                            # (depth, 3H, ra_m, dh)
        'wouth': jnp.stack(wouth).astype(cdt),                        # (depth, H, dh, dim)
        'fw1': jnp.stack(fw1).astype(cdt), 'fw2': jnp.stack(fw2).astype(cdt),
        'fw3': jnp.stack(fw3).astype(cdt), 'fw4': jnp.stack(fw4).astype(cdt),
        'fb': jnp.stack(fbias),                                       # (depth, 4, maxbw)
        'head_ln': jnp.stack([ones((dim,)), zeros((dim,))]),          # (2, dim)
        'head_wT': w((ncls, dim)).T.astype(cdt),                      # (dim, ncls)
        'head_b': w((1, ncls)),
    }
    return params


# ------------------------------ pure-JAX reference ---------------------------

def reference_forward(img, params, cfg):
    """Non-Pallas forward (f32 math, exact softmax / erf-GELU) for sanity check."""
    B, C, H, W = img.shape
    ph, pw = cfg['patch']
    dim, heads = cfg['dim'], cfg['heads']
    gh, gw = H // ph, W // pw
    N = gh * gw
    f32 = lambda a: a.astype(jnp.float32)

    def ln(v, g, b):
        m = jnp.mean(v, -1, keepdims=True)
        c = v - m
        return c * jax.lax.rsqrt(jnp.mean(c * c, -1, keepdims=True) + 1e-5) * g + b

    x = img.reshape(B, C, gh, ph, gw, pw)
    x = jnp.transpose(x, (0, 2, 4, 3, 5, 1)).reshape(B, N, ph * pw * C)
    x = x @ f32(params['patch_wT']) + params['patch_b'] + posemb_sincos_2d(gh, gw, dim)[None]

    rf = params['fw1'].shape[-1]
    mlp = params['fw2'].shape[-1]
    for l in range(cfg['depth']):
        g = params['ln4'][l]
        h = ln(x, g[0], g[1])
        low = jnp.einsum('bnd,cdr->cbnr', h, f32(params['w1s'][l]))
        w2 = f32(params['w2s'][l])
        q = jnp.einsum('bnr,hrd->bhnd', low[0], w2[:heads])
        k = jnp.einsum('bnr,hrd->bhnd', low[1], w2[heads:2 * heads])
        v = jnp.einsum('bnr,hrd->bhnd', low[2], w2[2 * heads:])
        s = jnp.einsum('bhqd,bhkd->bhqk', q, k)     # scale folded into w1s[q]
        p = jax.nn.softmax(s, axis=-1)
        o = jnp.einsum('bhqk,bhkd->bhqd', p, v)
        attn = jnp.einsum('bhnd,hde->bne', o, f32(params['wouth'][l]))
        y = x + attn
        f = ln(y, g[2], g[3])
        fb = params['fb'][l]
        f = f @ f32(params['fw1'][l]) + fb[0, :rf]
        f = f @ f32(params['fw2'][l]) + fb[1, :mlp]
        f = jax.nn.gelu(f, approximate=False)
        f = f @ f32(params['fw3'][l]) + fb[2, :rf]
        f = f @ f32(params['fw4'][l]) + fb[3, :dim]
        x = y + f
    hg = params['head_ln']
    pooled = ln(x[:, 0], hg[0], hg[1])
    return pooled @ f32(params['head_wT']) + params['head_b']


# ----------------------------------- main ------------------------------------

if __name__ == "__main__":
    cfg = dict(patch=(4, 4), num_classes=10, dim=32, depth=2,
               heads=4, dim_head=8, mlp_dim=64, channels=4,
               rs_attn=[8, 8], rs_ff=[8, 8])
    key = jax.random.PRNGKey(0)
    kimg, kparam = jax.random.split(key)
    img = jax.random.normal(kimg, (2, cfg['channels'], 16, 16), dtype=jnp.float32)
    params = init_params(kparam, cfg)

    fwd = jax.jit(functools.partial(vit_factorized_forward, cfg=cfg))
    out = fwd(img, params)
    jax.block_until_ready(out)

    assert out.shape == (2, cfg['num_classes'])
    assert bool(jnp.all(jnp.isfinite(out)))
    ref = reference_forward(img, params, cfg)
    # bf16 matmul operands + tanh-GELU + approx-reciprocal softmax => loose tol.
    assert bool(jnp.allclose(out, ref, atol=5e-2, rtol=5e-2)), (
        f"max abs err {float(jnp.max(jnp.abs(out - ref)))}")
    print("KERNEL_OK")
</pallas_src>

<mosaic_0001>
module attributes {stable_mosaic.version = 11 : i64} {
  func.func @_vit_kernel(%arg0: i32, %arg1: i32, %arg2: memref<1x16x64xf32, #tpu.memory_space<vmem>>, %arg3: memref<16x32xf32, #tpu.memory_space<vmem>>, %arg4: memref<64x32xbf16, #tpu.memory_space<vmem>>, %arg5: memref<1x32xf32, #tpu.memory_space<vmem>>, %arg6: memref<1x4x32xf32, #tpu.memory_space<vmem>>, %arg7: memref<1x3x32x8xbf16, #tpu.memory_space<vmem>>, %arg8: memref<1x12x8x8xbf16, #tpu.memory_space<vmem>>, %arg9: memref<1x4x8x32xbf16, #tpu.memory_space<vmem>>, %arg10: memref<1x32x8xbf16, #tpu.memory_space<vmem>>, %arg11: memref<1x8x64xbf16, #tpu.memory_space<vmem>>, %arg12: memref<1x64x8xbf16, #tpu.memory_space<vmem>>, %arg13: memref<1x8x32xbf16, #tpu.memory_space<vmem>>, %arg14: memref<1x4x64xf32, #tpu.memory_space<vmem>>, %arg15: memref<2x32xf32, #tpu.memory_space<vmem>>, %arg16: memref<32x10xbf16, #tpu.memory_space<vmem>>, %arg17: memref<1x10xf32, #tpu.memory_space<vmem>>, %arg18: memref<1x1x10xf32, #tpu.memory_space<vmem>>, %arg19: memref<16x32xf32, #tpu.memory_space<vmem>>) attributes {dimension_semantics = [#tpu.dimension_semantics<parallel>, #tpu.dimension_semantics<arbitrary>], iteration_bounds = array<i64: 2, 2>, scalar_prefetch = 0 : i64, scratch_operands = 1 : i64, tpu.core_type = #tpu.core_type<tc>, window_params = [{transform_indices = @transform_0, window_bounds = array<i64: 1, 16, 64>}, {pipeline_mode = #tpu.pipeline_mode<synchronous>, transform_indices = @transform_1, window_bounds = array<i64: 16, 32>}, {pipeline_mode = #tpu.pipeline_mode<synchronous>, transform_indices = @transform_2, window_bounds = array<i64: 64, 32>}, {pipeline_mode = #tpu.pipeline_mode<synchronous>, transform_indices = @transform_3, window_bounds = array<i64: 1, 32>}, {transform_indices = @transform_4, window_bounds = array<i64: 1, 4, 32>}, {transform_indices = @transform_5, window_bounds = array<i64: 1, 3, 32, 8>}, {transform_indices = @transform_6, window_bounds = array<i64: 1, 12, 8, 8>}, {transform_indices = @transform_7, window_bounds = array<i64: 1, 4, 8, 32>}, {transform_indices = @transform_8, window_bounds = array<i64: 1, 32, 8>}, {transform_indices = @transform_9, window_bounds = array<i64: 1, 8, 64>}, {transform_indices = @transform_10, window_bounds = array<i64: 1, 64, 8>}, {transform_indices = @transform_11, window_bounds = array<i64: 1, 8, 32>}, {transform_indices = @transform_12, window_bounds = array<i64: 1, 4, 64>}, {pipeline_mode = #tpu.pipeline_mode<synchronous>, transform_indices = @transform_13, window_bounds = array<i64: 2, 32>}, {pipeline_mode = #tpu.pipeline_mode<synchronous>, transform_indices = @transform_14, window_bounds = array<i64: 32, 10>}, {pipeline_mode = #tpu.pipeline_mode<synchronous>, transform_indices = @transform_15, window_bounds = array<i64: 1, 10>}, {transform_indices = @transform_16, window_bounds = array<i64: 1, 1, 10>}]} {
    %c0_i32 = arith.constant 0 : i32
    %0 = arith.cmpi eq, %arg1, %c0_i32 : i32
    %1 = arith.extui %0 : i1 to i32
    %c0_i32_0 = arith.constant 0 : i32
    %2 = arith.cmpi ne, %1, %c0_i32_0 : i32
    scf.if %2 {
      %c0_62 = arith.constant 0 : index
      %c0_63 = arith.constant 0 : index
      %c0_64 = arith.constant 0 : index
      %146 = vector.load %arg2[%c0_62, %c0_63, %c0_64] : memref<1x16x64xf32, #tpu.memory_space<vmem>>, vector<1x16x64xf32>
      %147 = vector.shape_cast %146 : vector<1x16x64xf32> to vector<16x64xf32>
      %148 = arith.truncf %147 : vector<16x64xf32> to vector<16x64xbf16>
      %c0_65 = arith.constant 0 : index
      %c0_66 = arith.constant 0 : index
      %149 = vector.load %arg4[%c0_65, %c0_66] : memref<64x32xbf16, #tpu.memory_space<vmem>>, vector<64x32xbf16>
      %cst_67 = arith.constant dense<0.000000e+00> : vector<16x32xf32>
      %150 = tpu.matmul %148, %149, %cst_67 {dimension_numbers = #tpu.dot_dimension_numbers<[1], [0], [0], [1], [0, 0, 1, 1], [], []>} : vector<16x64xbf16>, vector<64x32xbf16>, vector<16x32xf32> -> vector<16x32xf32>
      %c0_68 = arith.constant 0 : index
      %c0_69 = arith.constant 0 : index
      %151 = vector.load %arg5[%c0_68, %c0_69] : memref<1x32xf32, #tpu.memory_space<vmem>>, vector<1x32xf32>
      %152 = vector.broadcast %151 : vector<1x32xf32> to vector<16x32xf32>
      %153 = arith.addf %150, %152 : vector<16x32xf32>
      %c0_70 = arith.constant 0 : index
      %c0_71 = arith.constant 0 : index
      %154 = vector.load %arg3[%c0_70, %c0_71] : memref<16x32xf32, #tpu.memory_space<vmem>>, vector<16x32xf32>
      %155 = arith.addf %153, %154 : vector<16x32xf32>
      %c0_72 = arith.constant 0 : index
      %c0_73 = arith.constant 0 : index
      %156 = vector.load %arg19[%c0_72, %c0_73] : memref<16x32xf32, #tpu.memory_space<vmem>>, vector<16x32xf32>
      tpu.vector_store %arg19[%c0_72, %c0_73], %155 {strides = array<i32>} : memref<16x32xf32, #tpu.memory_space<vmem>>, vector<16x32xf32>,
    } else {
    }
    %c0 = arith.constant 0 : index
    %c0_1 = arith.constant 0 : index
    %3 = vector.load %arg19[%c0, %c0_1] : memref<16x32xf32, #tpu.memory_space<vmem>>, vector<16x32xf32>
    %c0_2 = arith.constant 0 : index
    %c0_3 = arith.constant 0 : index
    %c0_4 = arith.constant 0 : index
    %c0_5 = arith.constant 0 : index
    %4 = vector.load %arg8[%c0_2, %c0_3, %c0_4, %c0_5] : memref<1x12x8x8xbf16, #tpu.memory_space<vmem>>, vector<1x12x8x8xbf16>
    %5 = vector.shape_cast %4 : vector<1x12x8x8xbf16> to vector<12x8x8xbf16>
    %c0_6 = arith.constant 0 : index
    %c0_7 = arith.constant 0 : index
    %c0_8 = arith.constant 0 : index
    %6 = vector.load %arg6[%c0_6, %c0_7, %c0_8] : memref<1x4x32xf32, #tpu.memory_space<vmem>>, vector<1x4x32xf32>
    %7 = vector.shape_cast %6 : vector<1x4x32xf32> to vector<4x32xf32>
    %8 = vector.extract_strided_slice %7 {offsets = [0, 0], sizes = [1, 32], strides = [1, 1]} : vector<4x32xf32> to vector<1x32xf32>
    %9 = vector.extract_strided_slice %7 {offsets = [1, 0], sizes = [1, 32], strides = [1, 1]} : vector<4x32xf32> to vector<1x32xf32>
    %cst = arith.constant dense<0.000000e+00> : vector<16xf32>
    %10 = vector.multi_reduction <add>, %3, %cst [1] : vector<16x32xf32> to vector<16xf32>
    %11 = vector.shape_cast %10 : vector<16xf32> to vector<16x1xf32>
    %cst_9 = arith.constant 3.200000e+01 : f32
    %12 = vector.broadcast %cst_9 : f32 to vector<16x1xf32>
    %13 = arith.divf %11, %12 : vector<16x1xf32>
    %14 = vector.broadcast %13 : vector<16x1xf32> to vector<16x32xf32>
    %15 = arith.subf %3, %14 : vector<16x32xf32>
    %16 = arith.mulf %15, %15 : vector<16x32xf32>
    %cst_10 = arith.constant dense<0.000000e+00> : vector<16xf32>
    %17 = vector.multi_reduction <add>, %16, %cst_10 [1] : vector<16x32xf32> to vector<16xf32>
    %18 = vector.shape_cast %17 : vector<16xf32> to vector<16x1xf32>
    %cst_11 = arith.constant 3.200000e+01 : f32
    %19 = vector.broadcast %cst_11 : f32 to vector<16x1xf32>
    %20 = arith.divf %18, %19 : vector<16x1xf32>
    %cst_12 = arith.constant 9.99999974E-6 : f32
    %21 = vector.broadcast %cst_12 : f32 to vector<16x1xf32>
    %22 = arith.addf %20, %21 : vector<16x1xf32>
    %23 = math.rsqrt %22 : vector<16x1xf32>
    %24 = vector.broadcast %23 : vector<16x1xf32> to vector<16x32xf32>
    %25 = arith.mulf %15, %24 : vector<16x32xf32>
    %26 = vector.broadcast %8 : vector<1x32xf32> to vector<16x32xf32>
    %27 = arith.mulf %25, %26 : vector<16x32xf32>
    %28 = vector.broadcast %9 : vector<1x32xf32> to vector<16x32xf32>
    %29 = arith.addf %27, %28 : vector<16x32xf32>
    %30 = arith.truncf %29 : vector<16x32xf32> to vector<16x32xbf16>
    %31 = vector.shape_cast %30 : vector<16x32xbf16> to vector<1x16x32xbf16>
    %32 = vector.broadcast %31 : vector<1x16x32xbf16> to vector<3x16x32xbf16>
    %c0_13 = arith.constant 0 : index
    %c0_14 = arith.constant 0 : index
    %c0_15 = arith.constant 0 : index
    %c0_16 = arith.constant 0 : index
    %33 = vector.load %arg7[%c0_13, %c0_14, %c0_15, %c0_16] : memref<1x3x32x8xbf16, #tpu.memory_space<vmem>>, vector<1x3x32x8xbf16>
    %34 = vector.shape_cast %33 : vector<1x3x32x8xbf16> to vector<3x32x8xbf16>
    "tpu.trace_start"() <{level = 10 : i32, message = "cnd,cdr->cnr"}> : () -> ()
    %cst_17 = arith.constant dense<0.000000e+00> : vector<3x16x8xf32>
    %35 = tpu.matmul %32, %34, %cst_17 {dimension_numbers = #tpu.dot_dimension_numbers<[2], [1], [1], [2], [0, 0, 0, 1, 1, 2], [0], [0]>} : vector<3x16x32xbf16>, vector<3x32x8xbf16>, vector<3x16x8xf32> -> vector<3x16x8xf32>
    "tpu.trace_stop"() : () -> ()
    %36 = vector.extract_strided_slice %35 {offsets = [0, 0, 0], sizes = [1, 16, 8], strides = [1, 1, 1]} : vector<3x16x8xf32> to vector<1x16x8xf32>
    %37 = arith.truncf %36 : vector<1x16x8xf32> to vector<1x16x8xbf16>
    %38 = vector.shape_cast %37 : vector<1x16x8xbf16> to vector<1x16x8xbf16>
    %39 = vector.broadcast %38 : vector<1x16x8xbf16> to vector<4x16x8xbf16>
    %40 = vector.extract_strided_slice %35 {offsets = [1, 0, 0], sizes = [1, 16, 8], strides = [1, 1, 1]} : vector<3x16x8xf32> to vector<1x16x8xf32>
    %41 = arith.truncf %40 : vector<1x16x8xf32> to vector<1x16x8xbf16>
    %42 = vector.shape_cast %41 : vector<1x16x8xbf16> to vector<1x16x8xbf16>
    %43 = vector.broadcast %42 : vector<1x16x8xbf16> to vector<4x16x8xbf16>
    %44 = vector.extract_strided_slice %35 {offsets = [2, 0, 0], sizes = [1, 16, 8], strides = [1, 1, 1]} : vector<3x16x8xf32> to vector<1x16x8xf32>
    %45 = arith.truncf %44 : vector<1x16x8xf32> to vector<1x16x8xbf16>
    %46 = vector.shape_cast %45 : vector<1x16x8xbf16> to vector<1x16x8xbf16>
    %47 = vector.broadcast %46 : vector<1x16x8xbf16> to vector<4x16x8xbf16>
    %48 = vector.extract_strided_slice %5 {offsets = [0, 0, 0], sizes = [4, 8, 8], strides = [1, 1, 1]} : vector<12x8x8xbf16> to vector<4x8x8xbf16>
    "tpu.trace_start"() <{level = 10 : i32, message = "hnr,hrd->hnd"}> : () -> ()
    %cst_18 = arith.constant dense<0.000000e+00> : vector<4x16x8xf32>
    %49 = tpu.matmul %39, %48, %cst_18 {dimension_numbers = #tpu.dot_dimension_numbers<[2], [1], [1], [2], [0, 0, 0, 1, 1, 2], [0], [0]>} : vector<4x16x8xbf16>, vector<4x8x8xbf16>, vector<4x16x8xf32> -> vector<4x16x8xf32>
    "tpu.trace_stop"() : () -> ()
    %50 = vector.extract_strided_slice %5 {offsets = [4, 0, 0], sizes = [4, 8, 8], strides = [1, 1, 1]} : vector<12x8x8xbf16> to vector<4x8x8xbf16>
    "tpu.trace_start"() <{level = 10 : i32, message = "hnr,hrd->hnd"}> : () -> ()
    %cst_19 = arith.constant dense<0.000000e+00> : vector<4x16x8xf32>
    %51 = tpu.matmul %43, %50, %cst_19 {dimension_numbers = #tpu.dot_dimension_numbers<[2], [1], [1], [2], [0, 0, 0, 1, 1, 2], [0], [0]>} : vector<4x16x8xbf16>, vector<4x8x8xbf16>, vector<4x16x8xf32> -> vector<4x16x8xf32>
    "tpu.trace_stop"() : () -> ()
    %52 = vector.extract_strided_slice %5 {offsets = [8, 0, 0], sizes = [4, 8, 8], strides = [1, 1, 1]} : vector<12x8x8xbf16> to vector<4x8x8xbf16>
    "tpu.trace_start"() <{level = 10 : i32, message = "hnr,hrd->hnd"}> : () -> ()
    %cst_20 = arith.constant dense<0.000000e+00> : vector<4x16x8xf32>
    %53 = tpu.matmul %47, %52, %cst_20 {dimension_numbers = #tpu.dot_dimension_numbers<[2], [1], [1], [2], [0, 0, 0, 1, 1, 2], [0], [0]>} : vector<4x16x8xbf16>, vector<4x8x8xbf16>, vector<4x16x8xf32> -> vector<4x16x8xf32>
    "tpu.trace_stop"() : () -> ()
    %54 = arith.truncf %49 : vector<4x16x8xf32> to vector<4x16x8xbf16>
    %55 = arith.truncf %51 : vector<4x16x8xf32> to vector<4x16x8xbf16>
    "tpu.trace_start"() <{level = 10 : i32, message = "hqd,hkd->hqk"}> : () -> ()
    %cst_21 = arith.constant dense<0.000000e+00> : vector<4x16x16xf32>
    %56 = tpu.matmul %54, %55, %cst_21 {dimension_numbers = #tpu.dot_dimension_numbers<[2], [2], [1], [1], [0, 0, 0, 1, 1, 1], [0], [0]>} : vector<4x16x8xbf16>, vector<4x16x8xbf16>, vector<4x16x16xf32> -> vector<4x16x16xf32>
    "tpu.trace_stop"() : () -> ()
    %cst_22 = arith.constant dense<0xFF800000> : vector<4x16xf32>
    %57 = vector.multi_reduction <maximumf>, %56, %cst_22 [2] : vector<4x16x16xf32> to vector<4x16xf32>
    %58 = vector.shape_cast %57 : vector<4x16xf32> to vector<4x16x1xf32>
    %59 = vector.broadcast %58 : vector<4x16x1xf32> to vector<4x16x16xf32>
    %60 = arith.subf %56, %59 : vector<4x16x16xf32>
    %61 = math.exp %60 : vector<4x16x16xf32>
    %cst_23 = arith.constant dense<0.000000e+00> : vector<4x16xf32>
    %62 = vector.multi_reduction <add>, %61, %cst_23 [2] : vector<4x16x16xf32> to vector<4x16xf32>
    %63 = vector.shape_cast %62 : vector<4x16xf32> to vector<4x16x1xf32>
    %64 = tpu.reciprocal %63 {approx = true} : vector<4x16x1xf32> -> vector<4x16x1xf32>
    %65 = vector.broadcast %64 : vector<4x16x1xf32> to vector<4x16x16xf32>
    %66 = arith.mulf %61, %65 : vector<4x16x16xf32>
    %67 = arith.truncf %66 : vector<4x16x16xf32> to vector<4x16x16xbf16>
    %68 = arith.truncf %53 : vector<4x16x8xf32> to vector<4x16x8xbf16>
    "tpu.trace_start"() <{level = 10 : i32, message = "hqk,hkd->hqd"}> : () -> ()
    %cst_24 = arith.constant dense<0.000000e+00> : vector<4x16x8xf32>
    %69 = tpu.matmul %67, %68, %cst_24 {dimension_numbers = #tpu.dot_dimension_numbers<[2], [1], [1], [2], [0, 0, 0, 1, 1, 2], [0], [0]>} : vector<4x16x16xbf16>, vector<4x16x8xbf16>, vector<4x16x8xf32> -> vector<4x16x8xf32>
    "tpu.trace_stop"() : () -> ()
    %70 = arith.truncf %69 : vector<4x16x8xf32> to vector<4x16x8xbf16>
    %c0_25 = arith.constant 0 : index
    %c0_26 = arith.constant 0 : index
    %c0_27 = arith.constant 0 : index
    %c0_28 = arith.constant 0 : index
    %71 = vector.load %arg9[%c0_25, %c0_26, %c0_27, %c0_28] : memref<1x4x8x32xbf16, #tpu.memory_space<vmem>>, vector<1x4x8x32xbf16>
    %72 = vector.shape_cast %71 : vector<1x4x8x32xbf16> to vector<4x8x32xbf16>
    "tpu.trace_start"() <{level = 10 : i32, message = "hnd,hde->hne"}> : () -> ()
    %cst_29 = arith.constant dense<0.000000e+00> : vector<4x16x32xf32>
    %73 = tpu.matmul %70, %72, %cst_29 {dimension_numbers = #tpu.dot_dimension_numbers<[2], [1], [1], [2], [0, 0, 0, 1, 1, 2], [0], [0]>} : vector<4x16x8xbf16>, vector<4x8x32xbf16>, vector<4x16x32xf32> -> vector<4x16x32xf32>
    "tpu.trace_stop"() : () -> ()
    %cst_30 = arith.constant dense<0.000000e+00> : vector<16x32xf32>
    %74 = vector.multi_reduction <add>, %73, %cst_30 [0] : vector<4x16x32xf32> to vector<16x32xf32>
    %75 = arith.addf %3, %74 : vector<16x32xf32>
    %c0_31 = arith.constant 0 : index
    %c0_32 = arith.constant 0 : index
    %c0_33 = arith.constant 0 : index
    %76 = vector.load %arg14[%c0_31, %c0_32, %c0_33] : memref<1x4x64xf32, #tpu.memory_space<vmem>>, vector<1x4x64xf32>
    %77 = vector.shape_cast %76 : vector<1x4x64xf32> to vector<4x64xf32>
    %78 = vector.extract_strided_slice %7 {offsets = [2, 0], sizes = [1, 32], strides = [1, 1]} : vector<4x32xf32> to vector<1x32xf32>
    %79 = vector.extract_strided_slice %7 {offsets = [3, 0], sizes = [1, 32], strides = [1, 1]} : vector<4x32xf32> to vector<1x32xf32>
    %cst_34 = arith.constant dense<0.000000e+00> : vector<16xf32>
    %80 = vector.multi_reduction <add>, %75, %cst_34 [1] : vector<16x32xf32> to vector<16xf32>
    %81 = vector.shape_cast %80 : vector<16xf32> to vector<16x1xf32>
    %cst_35 = arith.constant 3.200000e+01 : f32
    %82 = vector.broadcast %cst_35 : f32 to vector<16x1xf32>
    %83 = arith.divf %81, %82 : vector<16x1xf32>
    %84 = vector.broadcast %83 : vector<16x1xf32> to vector<16x32xf32>
    %85 = arith.subf %75, %84 : vector<16x32xf32>
    %86 = arith.mulf %85, %85 : vector<16x32xf32>
    %cst_36 = arith.constant dense<0.000000e+00> : vector<16xf32>
    %87 = vector.multi_reduction <add>, %86, %cst_36 [1] : vector<16x32xf32> to vector<16xf32>
    %88 = vector.shape_cast %87 : vector<16xf32> to vector<16x1xf32>
    %cst_37 = arith.constant 3.200000e+01 : f32
    %89 = vector.broadcast %cst_37 : f32 to vector<16x1xf32>
    %90 = arith.divf %88, %89 : vector<16x1xf32>
    %cst_38 = arith.constant 9.99999974E-6 : f32
    %91 = vector.broadcast %cst_38 : f32 to vector<16x1xf32>
    %92 = arith.addf %90, %91 : vector<16x1xf32>
    %93 = math.rsqrt %92 : vector<16x1xf32>
    %94 = vector.broadcast %93 : vector<16x1xf32> to vector<16x32xf32>
    %95 = arith.mulf %85, %94 : vector<16x32xf32>
    %96 = vector.broadcast %78 : vector<1x32xf32> to vector<16x32xf32>
    %97 = arith.mulf %95, %96 : vector<16x32xf32>
    %98 = vector.broadcast %79 : vector<1x32xf32> to vector<16x32xf32>
    %99 = arith.addf %97, %98 : vector<16x32xf32>
    %100 = arith.truncf %99 : vector<16x32xf32> to vector<16x32xbf16>
    %c0_39 = arith.constant 0 : index
    %c0_40 = arith.constant 0 : index
    %c0_41 = arith.constant 0 : index
    %101 = vector.load %arg10[%c0_39, %c0_40, %c0_41] : memref<1x32x8xbf16, #tpu.memory_space<vmem>>, vector<1x32x8xbf16>
    %102 = vector.shape_cast %101 : vector<1x32x8xbf16> to vector<32x8xbf16>
    %cst_42 = arith.constant dense<0.000000e+00> : vector<16x8xf32>
    %103 = tpu.matmul %100, %102, %cst_42 {dimension_numbers = #tpu.dot_dimension_numbers<[1], [0], [0], [1], [0, 0, 1, 1], [], []>} : vector<16x32xbf16>, vector<32x8xbf16>, vector<16x8xf32> -> vector<16x8xf32>
    %104 = vector.extract_strided_slice %77 {offsets = [0, 0], sizes = [1, 8], strides = [1, 1]} : vector<4x64xf32> to vector<1x8xf32>
    %105 = vector.broadcast %104 : vector<1x8xf32> to vector<16x8xf32>
    %106 = arith.addf %103, %105 : vector<16x8xf32>
    %107 = arith.truncf %106 : vector<16x8xf32> to vector<16x8xbf16>
    %c0_43 = arith.constant 0 : index
    %c0_44 = arith.constant 0 : index
    %c0_45 = arith.constant 0 : index
    %108 = vector.load %arg11[%c0_43, %c0_44, %c0_45] : memref<1x8x64xbf16, #tpu.memory_space<vmem>>, vector<1x8x64xbf16>
    %109 = vector.shape_cast %108 : vector<1x8x64xbf16> to vector<8x64xbf16>
    %cst_46 = arith.constant dense<0.000000e+00> : vector<16x64xf32>
    %110 = tpu.matmul %107, %109, %cst_46 {dimension_numbers = #tpu.dot_dimension_numbers<[1], [0], [0], [1], [0, 0, 1, 1], [], []>} : vector<16x8xbf16>, vector<8x64xbf16>, vector<16x64xf32> -> vector<16x64xf32>
    %111 = vector.extract_strided_slice %77 {offsets = [1, 0], sizes = [1, 64], strides = [1, 1]} : vector<4x64xf32> to vector<1x64xf32>
    %112 = vector.broadcast %111 : vector<1x64xf32> to vector<16x64xf32>
    %113 = arith.addf %110, %112 : vector<16x64xf32>
    %cst_47 = arith.constant 5.000000e-01 : f32
    %114 = vector.broadcast %cst_47 : f32 to vector<16x64xf32>
    %115 = arith.mulf %114, %113 : vector<16x64xf32>
    %cst_48 = arith.constant 4.471500e-02 : f32
    %116 = vector.broadcast %cst_48 : f32 to vector<16x64xf32>
    %117 = arith.mulf %116, %113 : vector<16x64xf32>
    %118 = arith.mulf %117, %113 : vector<16x64xf32>
    %119 = arith.mulf %118, %113 : vector<16x64xf32>
    %120 = arith.addf %113, %119 : vector<16x64xf32>
    %cst_49 = arith.constant 0.797884583 : f32
    %121 = vector.broadcast %cst_49 : f32 to vector<16x64xf32>
    %122 = arith.mulf %121, %120 : vector<16x64xf32>
    %123 = math.tanh %122 : vector<16x64xf32>
    %cst_50 = arith.constant 1.000000e+00 : f32
    %124 = vector.broadcast %cst_50 : f32 to vector<16x64xf32>
    %125 = arith.addf %124, %123 : vector<16x64xf32>
    %126 = arith.mulf %115, %125 : vector<16x64xf32>
    %127 = arith.truncf %126 : vector<16x64xf32> to vector<16x64xbf16>
    %c0_51 = arith.constant 0 : index
    %c0_52 = arith.constant 0 : index
    %c0_53 = arith.constant 0 : index
    %128 = vector.load %arg12[%c0_51, %c0_52, %c0_53] : memref<1x64x8xbf16, #tpu.memory_space<vmem>>, vector<1x64x8xbf16>
    %129 = vector.shape_cast %128 : vector<1x64x8xbf16> to vector<64x8xbf16>
    %cst_54 = arith.constant dense<0.000000e+00> : vector<16x8xf32>
    %130 = tpu.matmul %127, %129, %cst_54 {dimension_numbers = #tpu.dot_dimension_numbers<[1], [0], [0], [1], [0, 0, 1, 1], [], []>} : vector<16x64xbf16>, vector<64x8xbf16>, vector<16x8xf32> -> vector<16x8xf32>
    %131 = vector.extract_strided_slice %77 {offsets = [2, 0], sizes = [1, 8], strides = [1, 1]} : vector<4x64xf32> to vector<1x8xf32>
    %132 = vector.broadcast %131 : vector<1x8xf32> to vector<16x8xf32>
    %133 = arith.addf %130, %132 : vector<16x8xf32>
    %134 = arith.truncf %133 : vector<16x8xf32> to vector<16x8xbf16>
    %c0_55 = arith.constant 0 : index
    %c0_56 = arith.constant 0 : index
    %c0_57 = arith.constant 0 : index
    %135 = vector.load %arg13[%c0_55, %c0_56, %c0_57] : memref<1x8x32xbf16, #tpu.memory_space<vmem>>, vector<1x8x32xbf16>
    %136 = vector.shape_cast %135 : vector<1x8x32xbf16> to vector<8x32xbf16>
    %cst_58 = arith.constant dense<0.000000e+00> : vector<16x32xf32>
    %137 = tpu.matmul %134, %136, %cst_58 {dimension_numbers = #tpu.dot_dimension_numbers<[1], [0], [0], [1], [0, 0, 1, 1], [], []>} : vector<16x8xbf16>, vector<8x32xbf16>, vector<16x32xf32> -> vector<16x32xf32>
    %138 = vector.extract_strided_slice %77 {offsets = [3, 0], sizes = [1, 32], strides = [1, 1]} : vector<4x64xf32> to vector<1x32xf32>
    %139 = vector.broadcast %138 : vector<1x32xf32> to vector<16x32xf32>
    %140 = arith.addf %137, %139 : vector<16x32xf32>
    %141 = arith.addf %75, %140 : vector<16x32xf32>
    %c0_59 = arith.constant 0 : index
    %c0_60 = arith.constant 0 : index
    %142 = vector.load %arg19[%c0_59, %c0_60] : memref<16x32xf32, #tpu.memory_space<vmem>>, vector<16x32xf32>
    tpu.vector_store %arg19[%c0_59, %c0_60], %141 {strides = array<i32>} : memref<16x32xf32, #tpu.memory_space<vmem>>, vector<16x32xf32>,
    %c1_i32 = arith.constant 1 : i32
    %143 = arith.cmpi eq, %arg1, %c1_i32 : i32
    %144 = arith.extui %143 : i1 to i32
    %c0_i32_61 = arith.constant 0 : i32
    %145 = arith.cmpi ne, %144, %c0_i32_61 : i32
    scf.if %145 {
      %c0_62 = arith.constant 0 : index
      %c0_63 = arith.constant 0 : index
      %146 = vector.load %arg15[%c0_62, %c0_63] : memref<2x32xf32, #tpu.memory_space<vmem>>, vector<2x32xf32>
      %147 = vector.extract_strided_slice %141 {offsets = [0, 0], sizes = [1, 32], strides = [1, 1]} : vector<16x32xf32> to vector<1x32xf32>
      %148 = vector.extract_strided_slice %146 {offsets = [0, 0], sizes = [1, 32], strides = [1, 1]} : vector<2x32xf32> to vector<1x32xf32>
      %149 = vector.extract_strided_slice %146 {offsets = [1, 0], sizes = [1, 32], strides = [1, 1]} : vector<2x32xf32> to vector<1x32xf32>
      %cst_64 = arith.constant dense<0.000000e+00> : vector<1xf32>
      %150 = vector.multi_reduction <add>, %147, %cst_64 [1] : vector<1x32xf32> to vector<1xf32>
      %151 = vector.shape_cast %150 : vector<1xf32> to vector<1x1xf32>
      %cst_65 = arith.constant 3.200000e+01 : f32
      %152 = vector.broadcast %cst_65 : f32 to vector<1x1xf32>
      %153 = arith.divf %151, %152 : vector<1x1xf32>
      %154 = vector.broadcast %153 : vector<1x1xf32> to vector<1x32xf32>
      %155 = arith.subf %147, %154 : vector<1x32xf32>
      %156 = arith.mulf %155, %155 : vector<1x32xf32>
      %cst_66 = arith.constant dense<0.000000e+00> : vector<1xf32>
      %157 = vector.multi_reduction <add>, %156, %cst_66 [1] : vector<1x32xf32> to vector<1xf32>
      %158 = vector.shape_cast %157 : vector<1xf32> to vector<1x1xf32>
      %cst_67 = arith.constant 3.200000e+01 : f32
      %159 = vector.broadcast %cst_67 : f32 to vector<1x1xf32>
      %160 = arith.divf %158, %159 : vector<1x1xf32>
      %cst_68 = arith.constant 9.99999974E-6 : f32
      %161 = vector.broadcast %cst_68 : f32 to vector<1x1xf32>
      %162 = arith.addf %160, %161 : vector<1x1xf32>
      %163 = math.rsqrt %162 : vector<1x1xf32>
      %164 = vector.broadcast %163 : vector<1x1xf32> to vector<1x32xf32>
      %165 = arith.mulf %155, %164 : vector<1x32xf32>
      %166 = arith.mulf %165, %148 : vector<1x32xf32>
      %167 = arith.addf %166, %149 : vector<1x32xf32>
      %168 = arith.truncf %167 : vector<1x32xf32> to vector<1x32xbf16>
      %c0_69 = arith.constant 0 : index
      %c0_70 = arith.constant 0 : index
      %169 = vector.load %arg16[%c0_69, %c0_70] : memref<32x10xbf16, #tpu.memory_space<vmem>>, vector<32x10xbf16>
      %cst_71 = arith.constant dense<0.000000e+00> : vector<1x10xf32>
      %170 = tpu.matmul %168, %169, %cst_71 {dimension_numbers = #tpu.dot_dimension_numbers<[1], [0], [0], [1], [0, 0, 1, 1], [], []>} : vector<1x32xbf16>, vector<32x10xbf16>, vector<1x10xf32> -> vector<1x10xf32>
      %c0_72 = arith.constant 0 : index
      %c0_73 = arith.constant 0 : index
      %171 = vector.load %arg17[%c0_72, %c0_73] : memref<1x10xf32, #tpu.memory_space<vmem>>, vector<1x10xf32>
      %172 = arith.addf %170, %171 : vector<1x10xf32>
      %c0_74 = arith.constant 0 : index
      %c0_75 = arith.constant 0 : index
      %c0_76 = arith.constant 0 : index
      %173 = vector.load %arg18[%c0_74, %c0_75, %c0_76] : memref<1x1x10xf32, #tpu.memory_space<vmem>>, vector<1x1x10xf32>
      %174 = vector.shape_cast %173 : vector<1x1x10xf32> to vector<1x10xf32>
      %175 = vector.shape_cast %172 : vector<1x10xf32> to vector<1x1x10xf32>
      tpu.vector_store %arg18[%c0_74, %c0_75, %c0_76], %175 {strides = array<i32>} : memref<1x1x10xf32, #tpu.memory_space<vmem>>, vector<1x1x10xf32>,
    } else {
    }
    return
  }
  func.func @transform_0(%arg0: i32, %arg1: i32) -> (i32, i32, i32) {
    %c0_i32 = arith.constant 0 : i32
    %c0_i32_0 = arith.constant 0 : i32
    %c0_i32_1 = arith.constant 0 : i32
    return %arg0, %c0_i32, %c0_i32_0 : i32, i32, i32
  }
  func.func @transform_1(%arg0: i32, %arg1: i32) -> (i32, i32) {
    %c0_i32 = arith.constant 0 : i32
    %c0_i32_0 = arith.constant 0 : i32
    %c0_i32_1 = arith.constant 0 : i32
    return %c0_i32, %c0_i32_0 : i32, i32
  }
  func.func @transform_2(%arg0: i32, %arg1: i32) -> (i32, i32) {
    %c0_i32 = arith.constant 0 : i32
    %c0_i32_0 = arith.constant 0 : i32
    %c0_i32_1 = arith.constant 0 : i32
    return %c0_i32, %c0_i32_0 : i32, i32
  }
  func.func @transform_3(%arg0: i32, %arg1: i32) -> (i32, i32) {
    %c0_i32 = arith.constant 0 : i32
    %c0_i32_0 = arith.constant 0 : i32
    %c0_i32_1 = arith.constant 0 : i32
    return %c0_i32, %c0_i32_0 : i32, i32
  }
  func.func @transform_4(%arg0: i32, %arg1: i32) -> (i32, i32, i32) {
    %c0_i32 = arith.constant 0 : i32
    %c0_i32_0 = arith.constant 0 : i32
    %c0_i32_1 = arith.constant 0 : i32
    return %arg1, %c0_i32, %c0_i32_0 : i32, i32, i32
  }
  func.func @transform_5(%arg0: i32, %arg1: i32) -> (i32, i32, i32, i32) {
    %c0_i32 = arith.constant 0 : i32
    %c0_i32_0 = arith.constant 0 : i32
    %c0_i32_1 = arith.constant 0 : i32
    %c0_i32_2 = arith.constant 0 : i32
    return %arg1, %c0_i32, %c0_i32_0, %c0_i32_1 : i32, i32, i32, i32
  }
  func.func @transform_6(%arg0: i32, %arg1: i32) -> (i32, i32, i32, i32) {
    %c0_i32 = arith.constant 0 : i32
    %c0_i32_0 = arith.constant 0 : i32
    %c0_i32_1 = arith.constant 0 : i32
    %c0_i32_2 = arith.constant 0 : i32
    return %arg1, %c0_i32, %c0_i32_0, %c0_i32_1 : i32, i32, i32, i32
  }
  func.func @transform_7(%arg0: i32, %arg1: i32) -> (i32, i32, i32, i32) {
    %c0_i32 = arith.constant 0 : i32
    %c0_i32_0 = arith.constant 0 : i32
    %c0_i32_1 = arith.constant 0 : i32
    %c0_i32_2 = arith.constant 0 : i32
    return %arg1, %c0_i32, %c0_i32_0, %c0_i32_1 : i32, i32, i32, i32
  }
  func.func @transform_8(%arg0: i32, %arg1: i32) -> (i32, i32, i32) {
    %c0_i32 = arith.constant 0 : i32
    %c0_i32_0 = arith.constant 0 : i32
    %c0_i32_1 = arith.constant 0 : i32
    return %arg1, %c0_i32, %c0_i32_0 : i32, i32, i32
  }
  func.func @transform_9(%arg0: i32, %arg1: i32) -> (i32, i32, i32) {
    %c0_i32 = arith.constant 0 : i32
    %c0_i32_0 = arith.constant 0 : i32
    %c0_i32_1 = arith.constant 0 : i32
    return %arg1, %c0_i32, %c0_i32_0 : i32, i32, i32
  }
  func.func @transform_10(%arg0: i32, %arg1: i32) -> (i32, i32, i32) {
    %c0_i32 = arith.constant 0 : i32
    %c0_i32_0 = arith.constant 0 : i32
    %c0_i32_1 = arith.constant 0 : i32
    return %arg1, %c0_i32, %c0_i32_0 : i32, i32, i32
  }
  func.func @transform_11(%arg0: i32, %arg1: i32) -> (i32, i32, i32) {
    %c0_i32 = arith.constant 0 : i32
    %c0_i32_0 = arith.constant 0 : i32
    %c0_i32_1 = arith.constant 0 : i32
    return %arg1, %c0_i32, %c0_i32_0 : i32, i32, i32
  }
  func.func @transform_12(%arg0: i32, %arg1: i32) -> (i32, i32, i32) {
    %c0_i32 = arith.constant 0 : i32
    %c0_i32_0 = arith.constant 0 : i32
    %c0_i32_1 = arith.constant 0 : i32
    return %arg1, %c0_i32, %c0_i32_0 : i32, i32, i32
  }
  func.func @transform_13(%arg0: i32, %arg1: i32) -> (i32, i32) {
    %c0_i32 = arith.constant 0 : i32
    %c0_i32_0 = arith.constant 0 : i32
    %c0_i32_1 = arith.constant 0 : i32
    return %c0_i32, %c0_i32_0 : i32, i32
  }
  func.func @transform_14(%arg0: i32, %arg1: i32) -> (i32, i32) {
    %c0_i32 = arith.constant 0 : i32
    %c0_i32_0 = arith.constant 0 : i32
    %c0_i32_1 = arith.constant 0 : i32
    return %c0_i32, %c0_i32_0 : i32, i32
  }
  func.func @transform_15(%arg0: i32, %arg1: i32) -> (i32, i32) {
    %c0_i32 = arith.constant 0 : i32
    %c0_i32_0 = arith.constant 0 : i32
    %c0_i32_1 = arith.constant 0 : i32
    return %c0_i32, %c0_i32_0 : i32, i32
  }
  func.func @transform_16(%arg0: i32, %arg1: i32) -> (i32, i32, i32) {
    %c0_i32 = arith.constant 0 : i32
    %c0_i32_0 = arith.constant 0 : i32
    %c0_i32_1 = arith.constant 0 : i32
    return %arg0, %c0_i32, %c0_i32_0 : i32, i32, i32
  }
}

</mosaic_0001>

<llo_original>
// kernel: mul.22
$region0: #{mul.22}
  %s0 = inlined_call_operand.vmem [shape: f32[4,4], index: 0, kind: input, shape index: {}]
  %s1 = inlined_call_operand.vmem [shape: f32[16], index: 1, kind: output, shape index: {}]
  $region1: #{mul.22} parent=0
    #allocation0 [shape = 'u8[4096]{0}', space=vmem, size = 0x1000, scoped, tag = 'scoped mem for output reshape']
    #allocation1 [shape = 'u8[4096]{0}', space=vmem, size = 0x1000, scoped, tag = 'scoped mem for input reshape']
    %s3 = ssub.s32 16, 1
    %v4 = vld [vmem:[%s0] sm:%s3]
    %5 = vst [vmem:[#allocation1] sm:%s3] %v4
    %v6 = vld [vmem:[#allocation1] sm:$0x1]
    %vm7 = vcmask 31744
    %8 = vst.msk [vmem:[#allocation0] sm:$0x1] %vm7, %v6
    %s9 = scalar_lea.vmem [#allocation1], 3
    %v10 = vld [vmem:[%s9] sm:$0x1]
    %11 = vrot.lane.b32.xlu0 %v10, 12
    %v12 = vpop.permute.xlu0 %11
    %vm13 = vcmask 130144
    %14 = vst.msk [vmem:[#allocation0] sm:$0x1] %vm13, %v12
    %s15 = scalar_lea.vmem [#allocation1], 2
    %v16 = vld [vmem:[%s15] sm:$0x1]
    %17 = vrot.lane.b32.xlu0 %v16, 8
    %v18 = vpop.permute.xlu0 %17
    %vm19 = vcmask 97344
    %20 = vst.msk [vmem:[#allocation0] sm:$0x1] %vm19, %v18
    %s21 = scalar_lea.vmem [#allocation1], 1
    %v22 = vld [vmem:[%s21] sm:$0x1]
    %23 = vrot.lane.b32.xlu0 %v22, 4
    %v24 = vpop.permute.xlu0 %23
    %vm25 = vcmask 64544
    %26 = vst.msk [vmem:[#allocation0] sm:$0x1] %vm25, %v24
    %s28 = ssub.s32 2, 1
    %v29 = vld [vmem:[#allocation0] sm:%s28]
    %s31 = ssub.s32 2, 1
    %32 = vst [vmem:[%s1] sm:%s31] %v29

// kernel: vit_factorized_forward.1
$region0: #{vit_factorized_forward.1}
  #allocation0 [shape = 'u32[]', space=smem, size = 0x4, offset = 0x4, fixed_abs, tag = 'smem constant byte address 0x4 - core index']
  #allocation1 [shape = 'u32[72,128]{1,0:T(1,128)}', space=vmem, size = 0x9000, scoped, tag = 'internal scratch']
  #allocation2 [shape = 'f32[16,32]{1,0:T(8,128)}', space=vmem, size = 0x2000, scoped, tag = 'scratch operand']
  %s0 = inlined_call_operand.vmem [shape: f32[2,16,64], index: 0, kind: input, shape index: {}]
  %s1 = inlined_call_operand.vmem [shape: f32[16,32], index: 1, kind: input, shape index: {}]
  %s2 = inlined_call_operand.vmem [shape: bf16[64,32], index: 2, kind: input, shape index: {}]
  %s3 = inlined_call_operand.vmem [shape: f32[1,32], index: 3, kind: input, shape index: {}]
  %s4 = inlined_call_operand.vmem [shape: f32[2,4,32], index: 4, kind: input, shape index: {}]
  %s5 = inlined_call_operand.vmem [shape: bf16[2,3,32,8], index: 5, kind: input, shape index: {}]
  %s6 = inlined_call_operand.vmem [shape: bf16[2,12,8,8], index: 6, kind: input, shape index: {}]
  %s7 = inlined_call_operand.vmem [shape: bf16[2,4,8,32], index: 7, kind: input, shape index: {}]
  %s8 = inlined_call_operand.vmem [shape: bf16[2,32,8], index: 8, kind: input, shape index: {}]
  %s9 = inlined_call_operand.vmem [shape: bf16[2,8,64], index: 9, kind: input, shape index: {}]
  %s10 = inlined_call_operand.vmem [shape: bf16[2,64,8], index: 10, kind: input, shape index: {}]
  %s11 = inlined_call_operand.vmem [shape: bf16[2,8,32], index: 11, kind: input, shape index: {}]
  %s12 = inlined_call_operand.vmem [shape: f32[2,4,64], index: 12, kind: input, shape index: {}]
  %s13 = inlined_call_operand.vmem [shape: f32[2,32], index: 13, kind: input, shape index: {}]
  %s14 = inlined_call_operand.vmem [shape: bf16[32,10], index: 14, kind: input, shape index: {}]
  %s15 = inlined_call_operand.vmem [shape: f32[1,10], index: 15, kind: input, shape index: {}]
  %s16 = inlined_call_operand.hbm [shape: f32[2,1,10], index: 16, kind: output, shape index: {}]
  %s17 = sld [smem:[#allocation0]]
  $region105: #{vit_factorized_forward.1} parent=0
    _
  %s19 = ssub.s32 1, %s17
  %s20 = scalar_select 0, %s19, %s17
  $region1: #{vit_factorized_forward.1} parent=0
    #allocation3 [shape = 'u8[1024]{0}', space=vmem, size = 0x400, scoped, tag = 'output window, operand 0']
    #allocation4 [shape = 's32[2]{0}', space=sflag, size = 0x8, scoped, tag = 'scoped memory for vit_factorized_forward.1']
    %21 = vsyncpa [#allocation4], 0
    %s22 = scalar_lea.sflag [#allocation4], 1
    %23 = vsyncpa %s22, 0
    loop: start=0, step=1, limit=6
    $region2: #{vit_factorized_forward.1} parent=1 // loop_pre_header
      _
    $region3: #{vit_factorized_forward.1} parent=1 // loop_header
      %s25 = sphi 0, %s29
      %p26 = scmp.ge.s32.totalorder %s25, 6
      %s32 = sphi 0, %s44
      %s33 = sphi 0, %s40
      %s34 = sphi 0, %s32
      %s35 = sphi 0, %s33
      %s36 = sphi 0, %s34
      %s37 = sphi 0, %s35
      %s47 = sphi 0, %s49
      %s50 = sphi 0, %s47
      %s51 = sphi 0, %s50
      %s67 = sphi 0, %s51
      %s71 = sphi 0, %s71
      %s73 = sphi 0, %s71
      %s74 = sphi 0, %s73
      %s88 = sphi 0, %s74
      %s92 = sphi 0, %s92
      %s94 = sphi 0, %s92
      %s95 = sphi 0, %s94
      %s109 = sphi 0, %s95
      %s113 = sphi 0, %s113
      %s115 = sphi 0, %s113
      %s116 = sphi 0, %s115
      %s130 = sphi 0, %s116
      %s136 = sphi 0, %s138
      %s139 = sphi 0, %s136
      %s140 = sphi 0, %s139
      %s156 = sphi 0, %s140
      %s162 = sphi 0, %s164
      %s165 = sphi 0, %s162
      %s166 = sphi 0, %s165
      %s182 = sphi 0, %s166
      %s188 = sphi 0, %s190
      %s191 = sphi 0, %s188
      %s192 = sphi 0, %s191
      %s208 = sphi 0, %s192
      %s214 = sphi 0, %s216
      %s217 = sphi 0, %s214
      %s218 = sphi 0, %s217
      %s234 = sphi 0, %s218
      %s240 = sphi 0, %s242
      %s243 = sphi 0, %s240
      %s244 = sphi 0, %s243
      %s260 = sphi 0, %s244
      %s266 = sphi 0, %s268
      %s269 = sphi 0, %s266
      %s270 = sphi 0, %s269
      %s286 = sphi 0, %s270
      %s292 = sphi 0, %s294
      %s295 = sphi 0, %s292
      %s296 = sphi 0, %s295
      %s312 = sphi 0, %s296
      %s318 = sphi 0, %s320
      %s321 = sphi 0, %s318
      %s322 = sphi 0, %s321
      %s338 = sphi 0, %s322
      %s344 = sphi 0, %s346
      %s347 = sphi 0, %s344
      %s348 = sphi 0, %s347
      %s364 = sphi 0, %s348
      %s368 = sphi 0, %s368
      %s370 = sphi 0, %s368
      %s371 = sphi 0, %s370
      %s385 = sphi 0, %s371
      %s389 = sphi 0, %s389
      %s391 = sphi 0, %s389
      %s392 = sphi 0, %s391
      %s406 = sphi 0, %s392
      %s410 = sphi 0, %s410
      %s412 = sphi 0, %s410
      %s413 = sphi 0, %s412
      %s427 = sphi 0, %s413
      %s433 = sphi 0, %s435
      %s436 = sphi 0, %s433
      %s437 = sphi 0, %s436
      %s453 = sphi 0, %s437
    $region4: #{vit_factorized_forward.1} parent=1 // loop_header_branch
      %28 = sbr.rel (%p26) target = $region8
    $region5: #{vit_factorized_forward.1} parent=1 // loop_body
      %s30 = ssub.s32 %s25, 1
      %s31 = ssub.s32 %s25, 2
      %s38 = sadd.s32 1, %s33
      %p39 = scmp.ge.s32.totalorder %s38, 2
      %s40 = scalar_select %p39, 0, %s38
      %s41 = sadd.s32 1, %s32
      %s42 = scalar_select %p39, %s41, %s32
      %p43 = scmp.ge.s32.totalorder %s42, 2
      %s44 = scalar_select %p43, 0, %s42
      %s45 = ssub.s32 %s32, %s44
      %p46 = scmp.eq.s32.totalorder %s45, 0
      %s48 = sadd.s32 %s47, 1
      %s49 = scalar_select %p46, %s47, %s48
      %p52 = pneg %p46
      %p53 = scmp.eq.s32.totalorder %s25, 3
      %p54 = por %p52, %p53
      %p55 = scmp.ne.s32.totalorder %s47, %s50
      %p56 = scmp.eq.s32.totalorder %s25, 0
      %p57 = por %p55, %p56
      %p58 = scmp.ne.s32.totalorder %s47, %s50
      %p59 = scmp.eq.s32.totalorder %s30, 3
      %p60 = por %p58, %p59
      %p61 = scmp.ne.s32.totalorder %s50, %s51
      %p62 = scmp.eq.s32.totalorder %s30, 0
      %p63 = por %p61, %p62
      %p64 = scmp.ne.s32.totalorder %s50, %s51
      %p65 = scmp.eq.s32.totalorder %s31, 3
      %p66 = por %p64, %p65
      %p68 = scmp.ne.s32.totalorder %s51, %s67
      %p69 = scmp.eq.s32.totalorder %s31, 0
      %p70 = por %p68, %p69
      %s72 = sadd.s32 %s71, 1
      %p75 = scmp.eq.s32.totalorder %s25, 3
      %p76 = scmp.ne.s32.totalorder %s71, %s73
      %p77 = scmp.eq.s32.totalorder %s25, 0
      %p78 = por %p76, %p77
      %p79 = scmp.ne.s32.totalorder %s71, %s73
      %p80 = scmp.eq.s32.totalorder %s30, 3
      %p81 = por %p79, %p80
      %p82 = scmp.ne.s32.totalorder %s73, %s74
      %p83 = scmp.eq.s32.totalorder %s30, 0
      %p84 = por %p82, %p83
      %p85 = scmp.ne.s32.totalorder %s73, %s74
      %p86 = scmp.eq.s32.totalorder %s31, 3
      %p87 = por %p85, %p86
      %p89 = scmp.ne.s32.totalorder %s74, %s88
      %p90 = scmp.eq.s32.totalorder %s31, 0
      %p91 = por %p89, %p90
      %s93 = sadd.s32 %s92, 1
      %p96 = scmp.eq.s32.totalorder %s25, 3
      %p97 = scmp.ne.s32.totalorder %s92, %s94
      %p98 = scmp.eq.s32.totalorder %s25, 0
      %p99 = por %p97, %p98
      %p100 = scmp.ne.s32.totalorder %s92, %s94
      %p101 = scmp.eq.s32.totalorder %s30, 3
      %p102 = por %p100, %p101
      %p103 = scmp.ne.s32.totalorder %s94, %s95
      %p104 = scmp.eq.s32.totalorder %s30, 0
      %p105 = por %p103, %p104
      %p106 = scmp.ne.s32.totalorder %s94, %s95
      %p107 = scmp.eq.s32.totalorder %s31, 3
      %p108 = por %p106, %p107
      %p110 = scmp.ne.s32.totalorder %s95, %s109
      %p111 = scmp.eq.s32.totalorder %s31, 0
      %p112 = por %p110, %p111
      %s114 = sadd.s32 %s113, 1
      %p117 = scmp.eq.s32.totalorder %s25, 3
      %p118 = scmp.ne.s32.totalorder %s113, %s115
      %p119 = scmp.eq.s32.totalorder %s25, 0
      %p120 = por %p118, %p119
      %p121 = scmp.ne.s32.totalorder %s113, %s115
      %p122 = scmp.eq.s32.totalorder %s30, 3
      %p123 = por %p121, %p122
      %p124 = scmp.ne.s32.totalorder %s115, %s116
      %p125 = scmp.eq.s32.totalorder %s30, 0
      %p126 = por %p124, %p125
      %p127 = scmp.ne.s32.totalorder %s115, %s116
      %p128 = scmp.eq.s32.totalorder %s31, 3
      %p129 = por %p127, %p128
      %p131 = scmp.ne.s32.totalorder %s116, %s130
      %p132 = scmp.eq.s32.totalorder %s31, 0
      %p133 = por %p131, %p132
      %s134 = ssub.s32 %s33, %s40
      %p135 = scmp.eq.s32.totalorder %s134, 0
      %s137 = sadd.s32 %s136, 1
      %s138 = scalar_select %p135, %s136, %s137
      %p141 = pneg %p135
      %p142 = scmp.eq.s32.totalorder %s25, 3
      %p143 = por %p141, %p142
      %p144 = scmp.ne.s32.totalorder %s136, %s139
      %p145 = scmp.eq.s32.totalorder %s25, 0
      %p146 = por %p144, %p145
      %p147 = scmp.ne.s32.totalorder %s136, %s139
      %p148 = scmp.eq.s32.totalorder %s30, 3
      %p149 = por %p147, %p148
      %p150 = scmp.ne.s32.totalorder %s139, %s140
      %p151 = scmp.eq.s32.totalorder %s30, 0
      %p152 = por %p150, %p151
      %p153 = scmp.ne.s32.totalorder %s139, %s140
      %p154 = scmp.eq.s32.totalorder %s31, 3
      %p155 = por %p153, %p154
      %p157 = scmp.ne.s32.totalorder %s140, %s156
      %p158 = scmp.eq.s32.totalorder %s31, 0
      %p159 = por %p157, %p158
      %s160 = ssub.s32 %s33, %s40
      %p161 = scmp.eq.s32.totalorder %s160, 0
      %s163 = sadd.s32 %s162, 1
      %s164 = scalar_select %p161, %s162, %s163
      %p167 = pneg %p161
      %p168 = scmp.eq.s32.totalorder %s25, 3
      %p169 = por %p167, %p168
      %p170 = scmp.ne.s32.totalorder %s162, %s165
      %p171 = scmp.eq.s32.totalorder %s25, 0
      %p172 = por %p170, %p171
      %p173 = scmp.ne.s32.totalorder %s162, %s165
      %p174 = scmp.eq.s32.totalorder %s30, 3
      %p175 = por %p173, %p174
      %p176 = scmp.ne.s32.totalorder %s165, %s166
      %p177 = scmp.eq.s32.totalorder %s30, 0
      %p178 = por %p176, %p177
      %p179 = scmp.ne.s32.totalorder %s165, %s166
      %p180 = scmp.eq.s32.totalorder %s31, 3
      %p181 = por %p179, %p180
      %p183 = scmp.ne.s32.totalorder %s166, %s182
      %p184 = scmp.eq.s32.totalorder %s31, 0
      %p185 = por %p183, %p184
      %s186 = ssub.s32 %s33, %s40
      %p187 = scmp.eq.s32.totalorder %s186, 0
      %s189 = sadd.s32 %s188, 1
      %s190 = scalar_select %p187, %s188, %s189
      %p193 = pneg %p187
      %p194 = scmp.eq.s32.totalorder %s25, 3
      %p195 = por %p193, %p194
      %p196 = scmp.ne.s32.totalorder %s188, %s191
      %p197 = scmp.eq.s32.totalorder %s25, 0
      %p198 = por %p196, %p197
      %p199 = scmp.ne.s32.totalorder %s188, %s191
      %p200 = scmp.eq.s32.totalorder %s30, 3
      %p201 = por %p199, %p200
      %p202 = scmp.ne.s32.totalorder %s191, %s192
      %p203 = scmp.eq.s32.totalorder %s30, 0
      %p204 = por %p202, %p203
      %p205 = scmp.ne.s32.totalorder %s191, %s192
      %p206 = scmp.eq.s32.totalorder %s31, 3
      %p207 = por %p205, %p206
      %p209 = scmp.ne.s32.totalorder %s192, %s208
      %p210 = scmp.eq.s32.totalorder %s31, 0
      %p211 = por %p209, %p210
      %s212 = ssub.s32 %s33, %s40
      %p213 = scmp.eq.s32.totalorder %s212, 0
      %s215 = sadd.s32 %s214, 1
      %s216 = scalar_select %p213, %s214, %s215
      %p219 = pneg %p213
      %p220 = scmp.eq.s32.totalorder %s25, 3
      %p221 = por %p219, %p220
      %p222 = scmp.ne.s32.totalorder %s214, %s217
      %p223 = scmp.eq.s32.totalorder %s25, 0
      %p224 = por %p222, %p223
      %p225 = scmp.ne.s32.totalorder %s214, %s217
      %p226 = scmp.eq.s32.totalorder %s30, 3
      %p227 = por %p225, %p226
      %p228 = scmp.ne.s32.totalorder %s217, %s218
      %p229 = scmp.eq.s32.totalorder %s30, 0
      %p230 = por %p228, %p229
      %p231 = scmp.ne.s32.totalorder %s217, %s218
      %p232 = scmp.eq.s32.totalorder %s31, 3
      %p233 = por %p231, %p232
      %p235 = scmp.ne.s32.totalorder %s218, %s234
      %p236 = scmp.eq.s32.totalorder %s31, 0
      %p237 = por %p235, %p236
      %s238 = ssub.s32 %s33, %s40
      %p239 = scmp.eq.s32.totalorder %s238, 0
      %s241 = sadd.s32 %s240, 1
      %s242 = scalar_select %p239, %s240, %s241
      %p245 = pneg %p239
      %p246 = scmp.eq.s32.totalorder %s25, 3
      %p247 = por %p245, %p246
      %p248 = scmp.ne.s32.totalorder %s240, %s243
      %p249 = scmp.eq.s32.totalorder %s25, 0
      %p250 = por %p248, %p249
      %p251 = scmp.ne.s32.totalorder %s240, %s243
      %p252 = scmp.eq.s32.totalorder %s30, 3
      %p253 = por %p251, %p252
      %p254 = scmp.ne.s32.totalorder %s243, %s244
      %p255 = scmp.eq.s32.totalorder %s30, 0
      %p256 = por %p254, %p255
      %p257 = scmp.ne.s32.totalorder %s243, %s244
      %p258 = scmp.eq.s32.totalorder %s31, 3
      %p259 = por %p257, %p258
      %p261 = scmp.ne.s32.totalorder %s244, %s260
      %p262 = scmp.eq.s32.totalorder %s31, 0
      %p263 = por %p261, %p262
      %s264 = ssub.s32 %s33, %s40
      %p265 = scmp.eq.s32.totalorder %s264, 0
      %s267 = sadd.s32 %s266, 1
      %s268 = scalar_select %p265, %s266, %s267
      %p271 = pneg %p265
      %p272 = scmp.eq.s32.totalorder %s25, 3
      %p273 = por %p271, %p272
      %p274 = scmp.ne.s32.totalorder %s266, %s269
      %p275 = scmp.eq.s32.totalorder %s25, 0
      %p276 = por %p274, %p275
      %p277 = scmp.ne.s32.totalorder %s266, %s269
      %p278 = scmp.eq.s32.totalorder %s30, 3
      %p279 = por %p277, %p278
      %p280 = scmp.ne.s32.totalorder %s269, %s270
      %p281 = scmp.eq.s32.totalorder %s30, 0
      %p282 = por %p280, %p281
      %p283 = scmp.ne.s32.totalorder %s269, %s270
      %p284 = scmp.eq.s32.totalorder %s31, 3
      %p285 = por %p283, %p284
      %p287 = scmp.ne.s32.totalorder %s270, %s286
      %p288 = scmp.eq.s32.totalorder %s31, 0
      %p289 = por %p287, %p288
      %s290 = ssub.s32 %s33, %s40
      %p291 = scmp.eq.s32.totalorder %s290, 0
      %s293 = sadd.s32 %s292, 1
      %s294 = scalar_select %p291, %s292, %s293
      %p297 = pneg %p291
      %p298 = scmp.eq.s32.totalorder %s25, 3
      %p299 = por %p297, %p298
      %p300 = scmp.ne.s32.totalorder %s292, %s295
      %p301 = scmp.eq.s32.totalorder %s25, 0
      %p302 = por %p300, %p301
      %p303 = scmp.ne.s32.totalorder %s292, %s295
      %p304 = scmp.eq.s32.totalorder %s30, 3
      %p305 = por %p303, %p304
      %p306 = scmp.ne.s32.totalorder %s295, %s296
      %p307 = scmp.eq.s32.totalorder %s30, 0
      %p308 = por %p306, %p307
      %p309 = scmp.ne.s32.totalorder %s295, %s296
      %p310 = scmp.eq.s32.totalorder %s31, 3
      %p311 = por %p309, %p310
      %p313 = scmp.ne.s32.totalorder %s296, %s312
      %p314 = scmp.eq.s32.totalorder %s31, 0
      %p315 = por %p313, %p314
      %s316 = ssub.s32 %s33, %s40
      %p317 = scmp.eq.s32.totalorder %s316, 0
      %s319 = sadd.s32 %s318, 1
      %s320 = scalar_select %p317, %s318, %s319
      %p323 = pneg %p317
      %p324 = scmp.eq.s32.totalorder %s25, 3
      %p325 = por %p323, %p324
      %p326 = scmp.ne.s32.totalorder %s318, %s321
      %p327 = scmp.eq.s32.totalorder %s25, 0
      %p328 = por %p326, %p327
      %p329 = scmp.ne.s32.totalorder %s318, %s321
      %p330 = scmp.eq.s32.totalorder %s30, 3
      %p331 = por %p329, %p330
      %p332 = scmp.ne.s32.totalorder %s321, %s322
      %p333 = scmp.eq.s32.totalorder %s30, 0
      %p334 = por %p332, %p333
      %p335 = scmp.ne.s32.totalorder %s321, %s322
      %p336 = scmp.eq.s32.totalorder %s31, 3
      %p337 = por %p335, %p336
      %p339 = scmp.ne.s32.totalorder %s322, %s338
      %p340 = scmp.eq.s32.totalorder %s31, 0
      %p341 = por %p339, %p340
      %s342 = ssub.s32 %s33, %s40
      %p343 = scmp.eq.s32.totalorder %s342, 0
      %s345 = sadd.s32 %s344, 1
      %s346 = scalar_select %p343, %s344, %s345
      %p349 = pneg %p343
      %p350 = scmp.eq.s32.totalorder %s25, 3
      %p351 = por %p349, %p350
      %p352 = scmp.ne.s32.totalorder %s344, %s347
      %p353 = scmp.eq.s32.totalorder %s25, 0
      %p354 = por %p352, %p353
      %p355 = scmp.ne.s32.totalorder %s344, %s347
      %p356 = scmp.eq.s32.totalorder %s30, 3
      %p357 = por %p355, %p356
      %p358 = scmp.ne.s32.totalorder %s347, %s348
      %p359 = scmp.eq.s32.totalorder %s30, 0
      %p360 = por %p358, %p359
      %p361 = scmp.ne.s32.totalorder %s347, %s348
      %p362 = scmp.eq.s32.totalorder %s31, 3
      %p363 = por %p361, %p362
      %p365 = scmp.ne.s32.totalorder %s348, %s364
      %p366 = scmp.eq.s32.totalorder %s31, 0
      %p367 = por %p365, %p366
      %s369 = sadd.s32 %s368, 1
      %p372 = scmp.eq.s32.totalorder %s25, 3
      %p373 = scmp.ne.s32.totalorder %s368, %s370
      %p374 = scmp.eq.s32.totalorder %s25, 0
      %p375 = por %p373, %p374
      %p376 = scmp.ne.s32.totalorder %s368, %s370
      %p377 = scmp.eq.s32.totalorder %s30, 3
      %p378 = por %p376, %p377
      %p379 = scmp.ne.s32.totalorder %s370, %s371
      %p380 = scmp.eq.s32.totalorder %s30, 0
      %p381 = por %p379, %p380
      %p382 = scmp.ne.s32.totalorder %s370, %s371
      %p383 = scmp.eq.s32.totalorder %s31, 3
      %p384 = por %p382, %p383
      %p386 = scmp.ne.s32.totalorder %s371, %s385
      %p387 = scmp.eq.s32.totalorder %s31, 0
      %p388 = por %p386, %p387
      %s390 = sadd.s32 %s389, 1
      %p393 = scmp.eq.s32.totalorder %s25, 3
      %p394 = scmp.ne.s32.totalorder %s389, %s391
      %p395 = scmp.eq.s32.totalorder %s25, 0
      %p396 = por %p394, %p395
      %p397 = scmp.ne.s32.totalorder %s389, %s391
      %p398 = scmp.eq.s32.totalorder %s30, 3
      %p399 = por %p397, %p398
      %p400 = scmp.ne.s32.totalorder %s391, %s392
      %p401 = scmp.eq.s32.totalorder %s30, 0
      %p402 = por %p400, %p401
      %p403 = scmp.ne.s32.totalorder %s391, %s392
      %p404 = scmp.eq.s32.totalorder %s31, 3
      %p405 = por %p403, %p404
      %p407 = scmp.ne.s32.totalorder %s392, %s406
      %p408 = scmp.eq.s32.totalorder %s31, 0
      %p409 = por %p407, %p408
      %s411 = sadd.s32 %s410, 1
      %p414 = scmp.eq.s32.totalorder %s25, 3
      %p415 = scmp.ne.s32.totalorder %s410, %s412
      %p416 = scmp.eq.s32.totalorder %s25, 0
      %p417 = por %p415, %p416
      %p418 = scmp.ne.s32.totalorder %s410, %s412
      %p419 = scmp.eq.s32.totalorder %s30, 3
      %p420 = por %p418, %p419
      %p421 = scmp.ne.s32.totalorder %s412, %s413
      %p422 = scmp.eq.s32.totalorder %s30, 0
      %p423 = por %p421, %p422
      %p424 = scmp.ne.s32.totalorder %s412, %s413
      %p425 = scmp.eq.s32.totalorder %s31, 3
      %p426 = por %p424, %p425
      %p428 = scmp.ne.s32.totalorder %s413, %s427
      %p429 = scmp.eq.s32.totalorder %s31, 0
      %p430 = por %p428, %p429
      %s431 = ssub.s32 %s32, %s44
      %p432 = scmp.eq.s32.totalorder %s431, 0
      %s434 = sadd.s32 %s433, 1
      %s435 = scalar_select %p432, %s433, %s434
      %p438 = pneg %p432
      %p439 = scmp.eq.s32.totalorder %s25, 3
      %p440 = por %p438, %p439
      %p441 = scmp.ne.s32.totalorder %s433, %s436
      %p442 = scmp.eq.s32.totalorder %s25, 0
      %p443 = por %p441, %p442
      %p444 = scmp.ne.s32.totalorder %s433, %s436
      %p445 = scmp.eq.s32.totalorder %s30, 3
      %p446 = por %p444, %p445
      %p447 = scmp.ne.s32.totalorder %s436, %s437
      %p448 = scmp.eq.s32.totalorder %s30, 0
      %p449 = por %p447, %p448
      %p450 = scmp.ne.s32.totalorder %s436, %s437
      %p451 = scmp.eq.s32.totalorder %s31, 3
      %p452 = por %p450, %p451
      %p454 = scmp.ne.s32.totalorder %s437, %s453
      %p455 = scmp.eq.s32.totalorder %s31, 0
      %p456 = por %p454, %p455
      %p457 = scmp.le.s32.totalorder 1, %s25
      %p458 = scmp.lt.s32.totalorder %s25, 5
      %p459 = pnand %p457, %p458
      %p460 = pneg %p459
      // Predicated region
      $region9: #{vit_factorized_forward.1} parent=5 // pred_check
        _
      $region10: #{vit_factorized_forward.1} parent=5 // pred_check_branch
        %462 = sbr.rel (%p459) target = $region12
      $region11: #{vit_factorized_forward.1} parent=5 // pred_region
        %s463 = ssub.s32 %s25, 1
        // Predicated region
        $region13: #{vit_factorized_forward.1} parent=11 // pred_check
          %p464 = pneg %p84
        $region14: #{vit_factorized_forward.1} parent=11 // pred_check_branch
          %466 = sbr.rel (%p464) target = $region16
        $region15: #{vit_factorized_forward.1} parent=11 // pred_region
          _
        $region16: #{vit_factorized_forward.1} parent=11 // pred_fallthru
          _
        // Predicated region
        $region17: #{vit_factorized_forward.1} parent=11 // pred_check
          %p467 = pneg %p105
        $region18: #{vit_factorized_forward.1} parent=11 // pred_check_branch
          %469 = sbr.rel (%p467) target = $region20
        $region19: #{vit_factorized_forward.1} parent=11 // pred_region
          _
        $region20: #{vit_factorized_forward.1} parent=11 // pred_fallthru
          _
        // Predicated region
        $region21: #{vit_factorized_forward.1} parent=11 // pred_check
          %p470 = pneg %p126
        $region22: #{vit_factorized_forward.1} parent=11 // pred_check_branch
          %472 = sbr.rel (%p470) target = $region24
        $region23: #{vit_factorized_forward.1} parent=11 // pred_region
          _
        $region24: #{vit_factorized_forward.1} parent=11 // pred_fallthru
          _
        // Predicated region
        $region25: #{vit_factorized_forward.1} parent=11 // pred_check
          %p473 = pneg %p381
        $region26: #{vit_factorized_forward.1} parent=11 // pred_check_branch
          %475 = sbr.rel (%p473) target = $region28
        $region27: #{vit_factorized_forward.1} parent=11 // pred_region
          _
        $region28: #{vit_factorized_forward.1} parent=11 // pred_fallthru
          _
        // Predicated region
        $region29: #{vit_factorized_forward.1} parent=11 // pred_check
          %p476 = pneg %p402
        $region30: #{vit_factorized_forward.1} parent=11 // pred_check_branch
          %478 = sbr.rel (%p476) target = $region32
        $region31: #{vit_factorized_forward.1} parent=11 // pred_region
          _
        $region32: #{vit_factorized_forward.1} parent=11 // pred_fallthru
          _
        // Predicated region
        $region33: #{vit_factorized_forward.1} parent=11 // pred_check
          %p479 = pneg %p423
        $region34: #{vit_factorized_forward.1} parent=11 // pred_check_branch
          %481 = sbr.rel (%p479) target = $region36
        $region35: #{vit_factorized_forward.1} parent=11 // pred_region
          _
        $region36: #{vit_factorized_forward.1} parent=11 // pred_fallthru
          _
      $region12: #{vit_factorized_forward.1} parent=5 // pred_fallthru
        _
      %p482 = scmp.lt.s32.totalorder %s25, 4
      // Predicated region
      $region37: #{vit_factorized_forward.1} parent=5 // pred_check
        %p483 = pneg %p482
      $region38: #{vit_factorized_forward.1} parent=5 // pred_check_branch
        %485 = sbr.rel (%p483) target = $region40
      $region39: #{vit_factorized_forward.1} parent=5 // pred_region
        // Predicated region
        $region41: #{vit_factorized_forward.1} parent=39 // pred_check
          %p486 = pneg %p57
        $region42: #{vit_factorized_forward.1} parent=39 // pred_check_branch
          %488 = sbr.rel (%p486) target = $region44
        $region43: #{vit_factorized_forward.1} parent=39 // pred_region
          %p489 = scmp.lt.s32.totalorder %s32, 1
          %s490 = scalar_select %p489, %s32, 1
          %s491 = smul.addr %s490, 2
          %s492 = smul.addr %s491, 8
          %s493 = scalar_lea.vmem %s0, %s492
        $region44: #{vit_factorized_forward.1} parent=39 // pred_fallthru
          _
        // Predicated region
        $region45: #{vit_factorized_forward.1} parent=39 // pred_check
          %p494 = pneg %p146
        $region46: #{vit_factorized_forward.1} parent=39 // pred_check_branch
          %496 = sbr.rel (%p494) target = $region48
        $region47: #{vit_factorized_forward.1} parent=39 // pred_region
          %p497 = scmp.lt.s32.totalorder %s33, 1
          %s498 = scalar_select %p497, %s33, 1
          %s499 = smul.addr %s498, 4
          %s500 = scalar_lea.vmem %s4, %s499
        $region48: #{vit_factorized_forward.1} parent=39 // pred_fallthru
          _
        // Predicated region
        $region49: #{vit_factorized_forward.1} parent=39 // pred_check
          %p501 = pneg %p172
        $region50: #{vit_factorized_forward.1} parent=39 // pred_check_branch
          %503 = sbr.rel (%p501) target = $region52
        $region51: #{vit_factorized_forward.1} parent=39 // pred_region
          %p504 = scmp.lt.s32.totalorder %s33, 1
          %s505 = scalar_select %p504, %s33, 1
          %s506 = smul.addr %s505, 12
          %s507 = smul.addr %s506, 4
          %s508 = scalar_lea.vmem %s5, %s507
        $region52: #{vit_factorized_forward.1} parent=39 // pred_fallthru
          _
        // Predicated region
        $region53: #{vit_factorized_forward.1} parent=39 // pred_check
          %p509 = pneg %p198
        $region54: #{vit_factorized_forward.1} parent=39 // pred_check_branch
          %511 = sbr.rel (%p509) target = $region56
        $region55: #{vit_factorized_forward.1} parent=39 // pred_region
          %p512 = scmp.lt.s32.totalorder %s33, 1
          %s513 = scalar_select %p512, %s33, 1
          %s514 = smul.addr %s513, 12
          %s515 = smul.addr %s514, 4
          %s516 = scalar_lea.vmem %s6, %s515
        $region56: #{vit_factorized_forward.1} parent=39 // pred_fallthru
          _
        // Predicated region
        $region57: #{vit_factorized_forward.1} parent=39 // pred_check
          %p517 = pneg %p224
        $region58: #{vit_factorized_forward.1} parent=39 // pred_check_branch
          %519 = sbr.rel (%p517) target = $region60
        $region59: #{vit_factorized_forward.1} parent=39 // pred_region
          %p520 = scmp.lt.s32.totalorder %s33, 1
          %s521 = scalar_select %p520, %s33, 1
          %s522 = smul.addr %s521, 4
          %s523 = smul.addr %s522, 4
          %s524 = scalar_lea.vmem %s7, %s523
        $region60: #{vit_factorized_forward.1} parent=39 // pred_fallthru
          _
        // Predicated region
        $region61: #{vit_factorized_forward.1} parent=39 // pred_check
          %p525 = pneg %p250
        $region62: #{vit_factorized_forward.1} parent=39 // pred_check_branch
          %527 = sbr.rel (%p525) target = $region64
        $region63: #{vit_factorized_forward.1} parent=39 // pred_region
          %p528 = scmp.lt.s32.totalorder %s33, 1
          %s529 = scalar_select %p528, %s33, 1
          %s530 = smul.addr %s529, 4
          %s531 = smul.addr %s530, 4
          %s532 = scalar_lea.vmem %s8, %s531
        $region64: #{vit_factorized_forward.1} parent=39 // pred_fallthru
          _
        // Predicated region
        $region65: #{vit_factorized_forward.1} parent=39 // pred_check
          %p533 = pneg %p276
        $region66: #{vit_factorized_forward.1} parent=39 // pred_check_branch
          %535 = sbr.rel (%p533) target = $region68
        $region67: #{vit_factorized_forward.1} parent=39 // pred_region
          %p536 = scmp.lt.s32.totalorder %s33, 1
          %s537 = scalar_select %p536, %s33, 1
          %s538 = smul.addr %s537, 4
          %s539 = scalar_lea.vmem %s9, %s538
        $region68: #{vit_factorized_forward.1} parent=39 // pred_fallthru
          _
        // Predicated region
        $region69: #{vit_factorized_forward.1} parent=39 // pred_check
          %p540 = pneg %p302
        $region70: #{vit_factorized_forward.1} parent=39 // pred_check_branch
          %542 = sbr.rel (%p540) target = $region72
        $region71: #{vit_factorized_forward.1} parent=39 // pred_region
          %p543 = scmp.lt.s32.totalorder %s33, 1
          %s544 = scalar_select %p543, %s33, 1
          %s545 = smul.addr %s544, 8
          %s546 = smul.addr %s545, 4
          %s547 = scalar_lea.vmem %s10, %s546
        $region72: #{vit_factorized_forward.1} parent=39 // pred_fallthru
          _
        // Predicated region
        $region73: #{vit_factorized_forward.1} parent=39 // pred_check
          %p548 = pneg %p328
        $region74: #{vit_factorized_forward.1} parent=39 // pred_check_branch
          %550 = sbr.rel (%p548) target = $region76
        $region75: #{vit_factorized_forward.1} parent=39 // pred_region
          %p551 = scmp.lt.s32.totalorder %s33, 1
          %s552 = scalar_select %p551, %s33, 1
          %s553 = smul.addr %s552, 4
          %s554 = scalar_lea.vmem %s11, %s553
        $region76: #{vit_factorized_forward.1} parent=39 // pred_fallthru
          _
        // Predicated region
        $region77: #{vit_factorized_forward.1} parent=39 // pred_check
          %p555 = pneg %p354
        $region78: #{vit_factorized_forward.1} parent=39 // pred_check_branch
          %557 = sbr.rel (%p555) target = $region80
        $region79: #{vit_factorized_forward.1} parent=39 // pred_region
          %p558 = scmp.lt.s32.totalorder %s33, 1
          %s559 = scalar_select %p558, %s33, 1
          %s560 = smul.addr %s559, 4
          %s561 = scalar_lea.vmem %s12, %s560
        $region80: #{vit_factorized_forward.1} parent=39 // pred_fallthru
          _
      $region40: #{vit_factorized_forward.1} parent=5 // pred_fallthru
        _
      %p562 = scmp.le.s32.totalorder 1, %s25
      %p563 = scmp.lt.s32.totalorder %s25, 5
      %p564 = pnand %p562, %p563
      %p565 = pneg %p564
      // Predicated region
      $region81: #{vit_factorized_forward.1} parent=5 // pred_check
        _
      $region82: #{vit_factorized_forward.1} parent=5 // pred_check_branch
        %567 = sbr.rel (%p564) target = $region84
      $region83: #{vit_factorized_forward.1} parent=5 // pred_region
        %s568 = ssub.s32 %s25, 1
        %p569 = scmp.lt.s32.totalorder %s34, 1
        %s570 = scalar_select %p569, %s34, 1
        %s571 = smul.addr %s570, 2
        %s572 = smul.addr %s571, 8
        %s573 = scalar_lea.vmem %s0, %s572
        %p574 = pneg %p63
        %p575 = pneg %p60
        %p576 = pneg %p84
        %p577 = pneg %p81
        %p578 = pneg %p105
        %p579 = pneg %p102
        %p580 = pneg %p126
        %p581 = pneg %p123
        %p582 = scmp.lt.s32.totalorder %s35, 1
        %s583 = scalar_select %p582, %s35, 1
        %s584 = smul.addr %s583, 4
        %s585 = scalar_lea.vmem %s4, %s584
        %p586 = pneg %p152
        %p587 = pneg %p149
        %p588 = scmp.lt.s32.totalorder %s35, 1
        %s589 = scalar_select %p588, %s35, 1
        %s590 = smul.addr %s589, 12
        %s591 = smul.addr %s590, 4
        %s592 = scalar_lea.vmem %s5, %s591
        %p593 = pneg %p178
        %p594 = pneg %p175
        %p595 = scmp.lt.s32.totalorder %s35, 1
        %s596 = scalar_select %p595, %s35, 1
        %s597 = smul.addr %s596, 12
        %s598 = smul.addr %s597, 4
        %s599 = scalar_lea.vmem %s6, %s598
        %p600 = pneg %p204
        %p601 = pneg %p201
        %p602 = scmp.lt.s32.totalorder %s35, 1
        %s603 = scalar_select %p602, %s35, 1
        %s604 = smul.addr %s603, 4
        %s605 = smul.addr %s604, 4
        %s606 = scalar_lea.vmem %s7, %s605
        %p607 = pneg %p230
        %p608 = pneg %p227
        %p609 = scmp.lt.s32.totalorder %s35, 1
        %s610 = scalar_select %p609, %s35, 1
        %s611 = smul.addr %s610, 4
        %s612 = smul.addr %s611, 4
        %s613 = scalar_lea.vmem %s8, %s612
        %p614 = pneg %p256
        %p615 = pneg %p253
        %p616 = scmp.lt.s32.totalorder %s35, 1
        %s617 = scalar_select %p616, %s35, 1
        %s618 = smul.addr %s617, 4
        %s619 = scalar_lea.vmem %s9, %s618
        %p620 = pneg %p282
        %p621 = pneg %p279
        %p622 = scmp.lt.s32.totalorder %s35, 1
        %s623 = scalar_select %p622, %s35, 1
        %s624 = smul.addr %s623, 8
        %s625 = smul.addr %s624, 4
        %s626 = scalar_lea.vmem %s10, %s625
        %p627 = pneg %p308
        %p628 = pneg %p305
        %p629 = scmp.lt.s32.totalorder %s35, 1
        %s630 = scalar_select %p629, %s35, 1
        %s631 = smul.addr %s630, 4
        %s632 = scalar_lea.vmem %s11, %s631
        %p633 = pneg %p334
        %p634 = pneg %p331
        %p635 = scmp.lt.s32.totalorder %s35, 1
        %s636 = scalar_select %p635, %s35, 1
        %s637 = smul.addr %s636, 4
        %s638 = scalar_lea.vmem %s12, %s637
        %p639 = pneg %p360
        %p640 = pneg %p357
        %p641 = pneg %p381
        %p642 = pneg %p378
        %p643 = pneg %p402
        %p644 = pneg %p399
        %p645 = pneg %p423
        %p646 = pneg %p420
        %p647 = pneg %p449
        %p648 = pneg %p446
        %s649 = sand.u32 %s436, 1
        %s650 = scalar_lea.sflag [#allocation4], %s649
        %s651 = sand.u32 %s436, 1
        %s652 = scalar_lea.vmem [#allocation3], %s651
        %p653 = scmp.lt.s32.totalorder %s34, 1
        %s654 = scalar_select %p653, %s34, 1
        %s655 = smul.addr %s654, 2
        %s656 = smul.addr %s655, 8
        %s657 = scalar_lea.vmem %s0, %s656
        %p658 = scmp.lt.s32.totalorder %s35, 1
        %s659 = scalar_select %p658, %s35, 1
        %s660 = smul.addr %s659, 4
        %s661 = scalar_lea.vmem %s4, %s660
        %p662 = scmp.lt.s32.totalorder %s35, 1
        %s663 = scalar_select %p662, %s35, 1
        %s664 = smul.addr %s663, 12
        %s665 = smul.addr %s664, 4
        %s666 = scalar_lea.vmem %s5, %s665
        %p667 = scmp.lt.s32.totalorder %s35, 1
        %s668 = scalar_select %p667, %s35, 1
        %s669 = smul.addr %s668, 12
        %s670 = smul.addr %s669, 4
        %s671 = scalar_lea.vmem %s6, %s670
        %p672 = scmp.lt.s32.totalorder %s35, 1
        %s673 = scalar_select %p672, %s35, 1
        %s674 = smul.addr %s673, 4
        %s675 = smul.addr %s674, 4
        %s676 = scalar_lea.vmem %s7, %s675
        %p677 = scmp.lt.s32.totalorder %s35, 1
        %s678 = scalar_select %p677, %s35, 1
        %s679 = smul.addr %s678, 4
        %s680 = smul.addr %s679, 4
        %s681 = scalar_lea.vmem %s8, %s680
        %p682 = scmp.lt.s32.totalorder %s35, 1
        %s683 = scalar_select %p682, %s35, 1
        %s684 = smul.addr %s683, 4
        %s685 = scalar_lea.vmem %s9, %s684
        %p686 = scmp.lt.s32.totalorder %s35, 1
        %s687 = scalar_select %p686, %s35, 1
        %s688 = smul.addr %s687, 8
        %s689 = smul.addr %s688, 4
        %s690 = scalar_lea.vmem %s10, %s689
        %p691 = scmp.lt.s32.totalorder %s35, 1
        %s692 = scalar_select %p691, %s35, 1
        %s693 = smul.addr %s692, 4
        %s694 = scalar_lea.vmem %s11, %s693
        %p695 = scmp.lt.s32.totalorder %s35, 1
        %s696 = scalar_select %p695, %s35, 1
        %s697 = smul.addr %s696, 4
        %s698 = scalar_lea.vmem %s12, %s697
        %p700 = scmp.eq.s32.totalorder %s35, 0
        // Predicated region
        $region85: #{vit_factorized_forward.1} parent=83 // pred_check
          %p701 = pneg %p700
        $region86: #{vit_factorized_forward.1} parent=83 // pred_check_branch
          %703 = sbr.rel (%p701) target = $region88
        $region87: #{vit_factorized_forward.1} parent=83 // pred_region
          %v704 = vld [vmem:[%s657] sm:$0xff]
          %v705 = vld [vmem:[%s657 + $0x8] sm:$0xff]
          %v706 = vpack.c.bf16 %v705, %v704
          %v707 = vld [vmem:[%s2] sm:$0xf]
          %v708 = vld [vmem:[%s2 + $0x4] sm:$0xf]
          %v709 = vld [vmem:[%s2 + $0x8] sm:$0xf]
          %v710 = vld [vmem:[%s2 + $0xc] sm:$0xf]
          %v711 = vld [vmem:[%s2 + $0x10] sm:$0xf]
          %v712 = vld [vmem:[%s2 + $0x14] sm:$0xf]
          %v713 = vld [vmem:[%s2 + $0x18] sm:$0xf]
          %v714 = vld [vmem:[%s2 + $0x1c] sm:$0xf]
          %v715 = vld [vmem:[%s3] sm:$0x1]
          %v717 = vperm.slane %v715, 0
          %v727 = vunpack.c.l.b16 %v707
          %v728 = vunpack.c.l.b16 %v708
          %v729 = vunpack.c.l.b16 %v709
          %v730 = vunpack.c.l.b16 %v710
          %v731 = vunpack.c.l.b16 %v711
          %v732 = vunpack.c.l.b16 %v712
          %v733 = vunpack.c.l.b16 %v713
          %v734 = vunpack.c.l.b16 %v714
          %v735 = vpack.c.b16 %v728, %v727
          %v736 = vpack.c.b16 %v730, %v729
          %v737 = vpack.c.b16 %v732, %v731
          %v738 = vpack.c.b16 %v734, %v733
          %vm743 = vcmask 523264
          %v745 = vsel %vm743, %v706, 0
          %747 = vmatpush.bf16.msra.mxu0 0
          %748 = vmatpush.bf16.msra.mxu0 0
          %749 = vmatpush.bf16.msra.mxu0 0
          %750 = vmatpush.bf16.msra.mxu0 0
          %751 = vmatpush.bf16.msra.mxu0 %v738
          %752 = vmatpush.bf16.msra.mxu0 %v737
          %753 = vmatpush.bf16.msra.mxu0 %v736
          %754 = vmatpush.bf16.msra.mxu0 %v735
          %755 = vmatmul.bf16.gmra.mxu0 %v745
          %v756 = vpop.f32.mrf.mxu0
          %v757 = vadd.f32 %v717, %v756
          %v758 = vpop.f32.mrf.mxu0
          %v759 = vadd.f32 %v717, %v758
          %760 = vdwg.mxu0
          %v761 = vld [vmem:[%s1] sm:$0xff]
          %v762 = vld [vmem:[%s1 + $0x8] sm:$0xff]
          %v763 = vadd.f32 %v757, %v761
          %v764 = vadd.f32 %v759, %v762
          %vm765 = vcmask 261120
          %766 = vst.msk [vmem:[#allocation2] sm:$0xff] %vm765, %v763
          %767 = vst.msk [vmem:[#allocation2 + $0x8] sm:$0xff] %vm765, %v764
        $region88: #{vit_factorized_forward.1} parent=83 // pred_fallthru
          _
        %v768 = vld [vmem:[#allocation2] sm:$0xff]
        %v769 = vld [vmem:[#allocation2 + $0x8] sm:$0xff]
        %v770 = vld [vmem:[%s671] sm:$0xf]
        %v771 = vld [vmem:[%s671 + $0x4] sm:$0xf]
        %v772 = vld [vmem:[%s671 + $0x8] sm:$0xf]
        %v773 = vld [vmem:[%s671 + $0xc] sm:$0xf]
        %v774 = vld [vmem:[%s671 + $0x10] sm:$0xf]
        %v775 = vld [vmem:[%s671 + $0x14] sm:$0xf]
        %v776 = vld [vmem:[%s671 + $0x18] sm:$0xf]
        %v777 = vld [vmem:[%s671 + $0x1c] sm:$0xf]
        %v778 = vld [vmem:[%s671 + $0x20] sm:$0xf]
        %v779 = vld [vmem:[%s671 + $0x24] sm:$0xf]
        %v780 = vld [vmem:[%s671 + $0x28] sm:$0xf]
        %v781 = vld [vmem:[%s671 + $0x2c] sm:$0xf]
        %v782 = vld [vmem:[%s661] sm:$0xf]
        %vm783 = vcmask 261120
        %v784 = vsel %vm783, %v768, 0.0
        %785 = vadd.xlane.f32.xlu0 %v784
        %v786 = vpop.xlane.xlu0 %785
        %v787 = vsel %vm783, %v769, 0.0
        %788 = vadd.xlane.f32.xlu0 %v787
        %v789 = vpop.xlane.xlu0 %788
        %v790 = vrcp.pop 32.0
        %v791 = vmul.f32 32.0, %v790
        %v792 = vsub.f32 1.0, %v791
        %v793 = vmul.f32 %v790, %v792
        %v794 = vadd.f32 %v790, %v793
        %vm795 = vweird.f32 %v790
        %v796 = vsel %vm795, %v790, %v794
        %v797 = vmul.f32 %v786, %v796
        %v798 = vmul.f32 %v789, %v796
        %v799 = vsub.f32 %v768, %v797
        %v800 = vsub.f32 %v769, %v798
        %v801 = vmul.f32 %v799, %v799
        %v802 = vmul.f32 %v800, %v800
        %v803 = vsel %vm783, %v801, 0.0
        %804 = vadd.xlane.f32.xlu0 %v803
        %v805 = vpop.xlane.xlu0 %804
        %v806 = vsel %vm783, %v802, 0.0
        %807 = vadd.xlane.f32.xlu0 %v806
        %v808 = vpop.xlane.xlu0 %807
        %v809 = vmul.f32 %v805, %v796
        %v810 = vmul.f32 %v808, %v796
        %v811 = vadd.f32 %v809, 1e-05
        %v812 = vadd.f32 %v810, 1e-05
        %v813 = vrsqrt.pop %v811
        %v814 = vmul.f32 %v813, %v811
        %v815 = vmul.f32 %v814, %v813
        %v816 = vmul.f32 0.5, %v815
        %v817 = vsub.f32 1.5, %v816
        %v818 = vmul.f32 %v813, %v817
        %vm819 = vweird.f32 %v811
        %vm820 = vweird.f32 %v813
        %vm821 = vmor %vm819, %vm820
        %v822 = vsel %vm821, %v813, %v818
        %v823 = vrsqrt.pop %v812
        %v824 = vmul.f32 %v823, %v812
        %v825 = vmul.f32 %v824, %v823
        %v826 = vmul.f32 0.5, %v825
        %v827 = vsub.f32 1.5, %v826
        %v828 = vmul.f32 %v823, %v827
        %vm829 = vweird.f32 %v812
        %vm830 = vweird.f32 %v823
        %vm831 = vmor %vm829, %vm830
        %v832 = vsel %vm831, %v823, %v828
        %v833 = vmul.f32 %v799, %v822
        %v834 = vmul.f32 %v800, %v832
        %v835 = vperm.slane %v782, 0
        %v836 = vmul.f32 %v833, %v835
        %v837 = vmul.f32 %v834, %v835
        %v838 = vperm.slane %v782, 1
        %v839 = vadd.f32 %v836, %v838
        %v840 = vadd.f32 %v837, %v838
        %v841 = vpack.c.bf16 %v839, %v839
        %v842 = vpack.c.bf16 %v840, %v840
        %v843 = vld [vmem:[%s666] sm:$0xf]
        %v844 = vld [vmem:[%s666 + $0x4] sm:$0xf]
        %v845 = vld [vmem:[%s666 + $0x8] sm:$0xf]
        %v846 = vld [vmem:[%s666 + $0xc] sm:$0xf]
        %v847 = vld [vmem:[%s666 + $0x10] sm:$0xf]
        %v848 = vld [vmem:[%s666 + $0x14] sm:$0xf]
        %v849 = vld [vmem:[%s666 + $0x18] sm:$0xf]
        %v850 = vld [vmem:[%s666 + $0x1c] sm:$0xf]
        %v851 = vld [vmem:[%s666 + $0x20] sm:$0xf]
        %v852 = vld [vmem:[%s666 + $0x24] sm:$0xf]
        %v853 = vld [vmem:[%s666 + $0x28] sm:$0xf]
        %v854 = vld [vmem:[%s666 + $0x2c] sm:$0xf]
        %v857 = vunpack.c.l.b16 %v841
        %v858 = vunpack.c.l.b16 %v842
        %v859 = vpack.c.b16 %v858, %v857
        %v864 = vunpack.c.l.b16 %v843
        %v865 = vunpack.c.l.b16 %v844
        %v866 = vunpack.c.l.b16 %v845
        %v867 = vunpack.c.l.b16 %v846
        %v868 = vpack.c.b16 %v865, %v864
        %v869 = vpack.c.b16 %v867, %v866
        %v873 = vsel %vm783, %v859, 0
        %875 = vmatpush.bf16.msra.mxu0 0
        %876 = vmatpush.bf16.msra.mxu0 0
        %877 = vmatpush.bf16.msra.mxu0 0
        %878 = vmatpush.bf16.msra.mxu0 0
        %879 = vmatpush.bf16.msra.mxu0 0
        %880 = vmatpush.bf16.msra.mxu0 0
        %881 = vmatpush.bf16.msra.mxu0 %v869
        %882 = vmatpush.bf16.msra.mxu0 %v868
        %883 = vmatmul.bf16.gmra.mxu0 %v873
        %v884 = vpop.f32.mrf.mxu0
        %v885 = vadd.f32 0.0, %v884
        %v886 = vpop.f32.mrf.mxu0
        %v887 = vadd.f32 0.0, %v886
        %888 = vdwg.mxu0
        %v893 = vunpack.c.l.b16 %v847
        %v894 = vunpack.c.l.b16 %v848
        %v895 = vunpack.c.l.b16 %v849
        %v896 = vunpack.c.l.b16 %v850
        %v897 = vpack.c.b16 %v894, %v893
        %v898 = vpack.c.b16 %v896, %v895
        %901 = vmatpush.bf16.msra.mxu0 0
        %902 = vmatpush.bf16.msra.mxu0 0
        %903 = vmatpush.bf16.msra.mxu0 0
        %904 = vmatpush.bf16.msra.mxu0 0
        %905 = vmatpush.bf16.msra.mxu0 0
        %906 = vmatpush.bf16.msra.mxu0 0
        %907 = vmatpush.bf16.msra.mxu0 %v898
        %908 = vmatpush.bf16.msra.mxu0 %v897
        %909 = vmatmul.bf16.gmra.mxu0 %v873
        %v910 = vpop.f32.mrf.mxu0
        %v911 = vadd.f32 0.0, %v910
        %v912 = vpop.f32.mrf.mxu0
        %v913 = vadd.f32 0.0, %v912
        %914 = vdwg.mxu0
        %v919 = vunpack.c.l.b16 %v851
        %v920 = vunpack.c.l.b16 %v852
        %v921 = vunpack.c.l.b16 %v853
        %v922 = vunpack.c.l.b16 %v854
        %v923 = vpack.c.b16 %v920, %v919
        %v924 = vpack.c.b16 %v922, %v921
        %927 = vmatpush.bf16.msra.mxu0 0
        %928 = vmatpush.bf16.msra.mxu0 0
        %929 = vmatpush.bf16.msra.mxu0 0
        %930 = vmatpush.bf16.msra.mxu0 0
        %931 = vmatpush.bf16.msra.mxu0 0
        %932 = vmatpush.bf16.msra.mxu0 0
        %933 = vmatpush.bf16.msra.mxu0 %v924
        %934 = vmatpush.bf16.msra.mxu0 %v923
        %935 = vmatmul.bf16.gmra.mxu0 %v873
        %v936 = vpop.f32.mrf.mxu0
        %v937 = vadd.f32 0.0, %v936
        %v938 = vpop.f32.mrf.mxu0
        %v939 = vadd.f32 0.0, %v938
        %940 = vdwg.mxu0
        %v941 = vpack.c.bf16 %v885, %v885
        %v942 = vpack.c.bf16 %v887, %v887
        %v943 = vpack.c.bf16 %v911, %v911
        %v944 = vpack.c.bf16 %v913, %v913
        %v945 = vpack.c.bf16 %v937, %v937
        %v946 = vpack.c.bf16 %v939, %v939
        %v949 = vunpack.c.l.b16 %v941
        %v950 = vunpack.c.l.b16 %v942
        %v951 = vpack.c.b16 %v950, %v949
        %vm952 = vcmask 64512
        %v954 = vsel %vm952, %v951, 0
        %vm956 = vcmask 1043456
        %v958 = vsel %vm956, %v770, 0
        %960 = vmatpush.bf16.msra.mxu0 0
        %961 = vmatpush.bf16.msra.mxu0 0
        %962 = vmatpush.bf16.msra.mxu0 0
        %963 = vmatpush.bf16.msra.mxu0 0
        %964 = vmatpush.bf16.msra.mxu0 0
        %965 = vmatpush.bf16.msra.mxu0 0
        %966 = vmatpush.bf16.msra.mxu0 0
        %967 = vmatpush.bf16.msra.mxu0 %v958
        %968 = vmatmul.bf16.gmra.mxu0 %v954
        %v969 = vpop.f32.mrf.mxu0
        %v970 = vadd.f32 0.0, %v969
        %v971 = vpop.f32.mrf.mxu0
        %v972 = vadd.f32 0.0, %v971
        %973 = vdwg.mxu0
        %v975 = vsel %vm956, %v771, 0
        %977 = vmatpush.bf16.msra.mxu0 0
        %978 = vmatpush.bf16.msra.mxu0 0
        %979 = vmatpush.bf16.msra.mxu0 0
        %980 = vmatpush.bf16.msra.mxu0 0
        %981 = vmatpush.bf16.msra.mxu0 0
        %982 = vmatpush.bf16.msra.mxu0 0
        %983 = vmatpush.bf16.msra.mxu0 0
        %984 = vmatpush.bf16.msra.mxu0 %v975
        %985 = vmatmul.bf16.gmra.mxu0 %v954
        %v986 = vpop.f32.mrf.mxu0
        %v987 = vadd.f32 0.0, %v986
        %v988 = vpop.f32.mrf.mxu0
        %v989 = vadd.f32 0.0, %v988
        %990 = vdwg.mxu0
        %v992 = vsel %vm956, %v772, 0
        %994 = vmatpush.bf16.msra.mxu0 0
        %995 = vmatpush.bf16.msra.mxu0 0
        %996 = vmatpush.bf16.msra.mxu0 0
        %997 = vmatpush.bf16.msra.mxu0 0
        %998 = vmatpush.bf16.msra.mxu0 0
        %999 = vmatpush.bf16.msra.mxu0 0
        %1000 = vmatpush.bf16.msra.mxu0 0
        %1001 = vmatpush.bf16.msra.mxu0 %v992
        %1002 = vmatmul.bf16.gmra.mxu0 %v954
        %v1003 = vpop.f32.mrf.mxu0
        %v1004 = vadd.f32 0.0, %v1003
        %v1005 = vpop.f32.mrf.mxu0
        %v1006 = vadd.f32 0.0, %v1005
        %1007 = vdwg.mxu0
        %v1009 = vsel %vm956, %v773, 0
        %1011 = vmatpush.bf16.msra.mxu0 0
        %1012 = vmatpush.bf16.msra.mxu0 0
        %1013 = vmatpush.bf16.msra.mxu0 0
        %1014 = vmatpush.bf16.msra.mxu0 0
        %1015 = vmatpush.bf16.msra.mxu0 0
        %1016 = vmatpush.bf16.msra.mxu0 0
        %1017 = vmatpush.bf16.msra.mxu0 0
        %1018 = vmatpush.bf16.msra.mxu0 %v1009
        %1019 = vmatmul.bf16.gmra.mxu0 %v954
        %v1020 = vpop.f32.mrf.mxu0
        %v1021 = vadd.f32 0.0, %v1020
        %v1022 = vpop.f32.mrf.mxu0
        %v1023 = vadd.f32 0.0, %v1022
        %1024 = vdwg.mxu0
        %v1027 = vunpack.c.l.b16 %v943
        %v1028 = vunpack.c.l.b16 %v944
        %v1029 = vpack.c.b16 %v1028, %v1027
        %v1031 = vsel %vm952, %v1029, 0
        %v1034 = vsel %vm956, %v774, 0
        %1036 = vmatpush.bf16.msra.mxu0 0
        %1037 = vmatpush.bf16.msra.mxu0 0
        %1038 = vmatpush.bf16.msra.mxu0 0
        %1039 = vmatpush.bf16.msra.mxu0 0
        %1040 = vmatpush.bf16.msra.mxu0 0
        %1041 = vmatpush.bf16.msra.mxu0 0
        %1042 = vmatpush.bf16.msra.mxu0 0
        %1043 = vmatpush.bf16.msra.mxu0 %v1034
        %1044 = vmatmul.bf16.gmra.mxu0 %v1031
        %v1045 = vpop.f32.mrf.mxu0
        %v1046 = vadd.f32 0.0, %v1045
        %v1047 = vpop.f32.mrf.mxu0
        %v1048 = vadd.f32 0.0, %v1047
        %1049 = vdwg.mxu0
        %v1051 = vsel %vm956, %v775, 0
        %1053 = vmatpush.bf16.msra.mxu0 0
        %1054 = vmatpush.bf16.msra.mxu0 0
        %1055 = vmatpush.bf16.msra.mxu0 0
        %1056 = vmatpush.bf16.msra.mxu0 0
        %1057 = vmatpush.bf16.msra.mxu0 0
        %1058 = vmatpush.bf16.msra.mxu0 0
        %1059 = vmatpush.bf16.msra.mxu0 0
        %1060 = vmatpush.bf16.msra.mxu0 %v1051
        %1061 = vmatmul.bf16.gmra.mxu0 %v1031
        %v1062 = vpop.f32.mrf.mxu0
        %v1063 = vadd.f32 0.0, %v1062
        %v1064 = vpop.f32.mrf.mxu0
        %v1065 = vadd.f32 0.0, %v1064
        %1066 = vdwg.mxu0
        %v1068 = vsel %vm956, %v776, 0
        %1070 = vmatpush.bf16.msra.mxu0 0
        %1071 = vmatpush.bf16.msra.mxu0 0
        %1072 = vmatpush.bf16.msra.mxu0 0
        %1073 = vmatpush.bf16.msra.mxu0 0
        %1074 = vmatpush.bf16.msra.mxu0 0
        %1075 = vmatpush.bf16.msra.mxu0 0
        %1076 = vmatpush.bf16.msra.mxu0 0
        %1077 = vmatpush.bf16.msra.mxu0 %v1068
        %1078 = vmatmul.bf16.gmra.mxu0 %v1031
        %v1079 = vpop.f32.mrf.mxu0
        %v1080 = vadd.f32 0.0, %v1079
        %v1081 = vpop.f32.mrf.mxu0
        %v1082 = vadd.f32 0.0, %v1081
        %1083 = vdwg.mxu0
        %v1085 = vsel %vm956, %v777, 0
        %1087 = vmatpush.bf16.msra.mxu0 0
        %1088 = vmatpush.bf16.msra.mxu0 0
        %1089 = vmatpush.bf16.msra.mxu0 0
        %1090 = vmatpush.bf16.msra.mxu0 0
        %1091 = vmatpush.bf16.msra.mxu0 0
        %1092 = vmatpush.bf16.msra.mxu0 0
        %1093 = vmatpush.bf16.msra.mxu0 0
        %1094 = vmatpush.bf16.msra.mxu0 %v1085
        %1095 = vmatmul.bf16.gmra.mxu0 %v1031
        %v1096 = vpop.f32.mrf.mxu0
        %v1097 = vadd.f32 0.0, %v1096
        %v1098 = vpop.f32.mrf.mxu0
        %v1099 = vadd.f32 0.0, %v1098
        %1100 = vdwg.mxu0
        %v1103 = vunpack.c.l.b16 %v945
        %v1104 = vunpack.c.l.b16 %v946
        %v1105 = vpack.c.b16 %v1104, %v1103
        %v1107 = vsel %vm952, %v1105, 0
        %v1110 = vsel %vm956, %v778, 0
        %1112 = vmatpush.bf16.msra.mxu0 0
        %1113 = vmatpush.bf16.msra.mxu0 0
        %1114 = vmatpush.bf16.msra.mxu0 0
        %1115 = vmatpush.bf16.msra.mxu0 0
        %1116 = vmatpush.bf16.msra.mxu0 0
        %1117 = vmatpush.bf16.msra.mxu0 0
        %1118 = vmatpush.bf16.msra.mxu0 0
        %1119 = vmatpush.bf16.msra.mxu0 %v1110
        %1120 = vmatmul.bf16.gmra.mxu0 %v1107
        %v1121 = vpop.f32.mrf.mxu0
        %v1122 = vadd.f32 0.0, %v1121
        %v1123 = vpop.f32.mrf.mxu0
        %v1124 = vadd.f32 0.0, %v1123
        %1125 = vdwg.mxu0
        %v1127 = vsel %vm956, %v779, 0
        %1129 = vmatpush.bf16.msra.mxu0 0
        %1130 = vmatpush.bf16.msra.mxu0 0
        %1131 = vmatpush.bf16.msra.mxu0 0
        %1132 = vmatpush.bf16.msra.mxu0 0
        %1133 = vmatpush.bf16.msra.mxu0 0
        %1134 = vmatpush.bf16.msra.mxu0 0
        %1135 = vmatpush.bf16.msra.mxu0 0
        %1136 = vmatpush.bf16.msra.mxu0 %v1127
        %1137 = vmatmul.bf16.gmra.mxu0 %v1107
        %v1138 = vpop.f32.mrf.mxu0
        %v1139 = vadd.f32 0.0, %v1138
        %v1140 = vpop.f32.mrf.mxu0
        %v1141 = vadd.f32 0.0, %v1140
        %1142 = vdwg.mxu0
        %v1144 = vsel %vm956, %v780, 0
        %1146 = vmatpush.bf16.msra.mxu0 0
        %1147 = vmatpush.bf16.msra.mxu0 0
        %1148 = vmatpush.bf16.msra.mxu0 0
        %1149 = vmatpush.bf16.msra.mxu0 0
        %1150 = vmatpush.bf16.msra.mxu0 0
        %1151 = vmatpush.bf16.msra.mxu0 0
        %1152 = vmatpush.bf16.msra.mxu0 0
        %1153 = vmatpush.bf16.msra.mxu0 %v1144
        %1154 = vmatmul.bf16.gmra.mxu0 %v1107
        %v1155 = vpop.f32.mrf.mxu0
        %v1156 = vadd.f32 0.0, %v1155
        %v1157 = vpop.f32.mrf.mxu0
        %v1158 = vadd.f32 0.0, %v1157
        %1159 = vdwg.mxu0
        %v1161 = vsel %vm956, %v781, 0
        %1163 = vmatpush.bf16.msra.mxu0 0
        %1164 = vmatpush.bf16.msra.mxu0 0
        %1165 = vmatpush.bf16.msra.mxu0 0
        %1166 = vmatpush.bf16.msra.mxu0 0
        %1167 = vmatpush.bf16.msra.mxu0 0
        %1168 = vmatpush.bf16.msra.mxu0 0
        %1169 = vmatpush.bf16.msra.mxu0 0
        %1170 = vmatpush.bf16.msra.mxu0 %v1161
        %1171 = vmatmul.bf16.gmra.mxu0 %v1107
        %v1172 = vpop.f32.mrf.mxu0
        %v1173 = vadd.f32 0.0, %v1172
        %v1174 = vpop.f32.mrf.mxu0
        %v1175 = vadd.f32 0.0, %v1174
        %1176 = vdwg.mxu0
        %v1177 = vpack.c.bf16 %v970, %v970
        %v1178 = vpack.c.bf16 %v972, %v972
        %v1179 = vpack.c.bf16 %v987, %v987
        %v1180 = vpack.c.bf16 %v989, %v989
        %v1181 = vpack.c.bf16 %v1004, %v1004
        %v1182 = vpack.c.bf16 %v1006, %v1006
        %v1183 = vpack.c.bf16 %v1021, %v1021
        %v1184 = vpack.c.bf16 %v1023, %v1023
        %v1185 = vpack.c.bf16 %v1046, %v1046
        %v1186 = vpack.c.bf16 %v1048, %v1048
        %v1187 = vpack.c.bf16 %v1063, %v1063
        %v1188 = vpack.c.bf16 %v1065, %v1065
        %v1189 = vpack.c.bf16 %v1080, %v1080
        %v1190 = vpack.c.bf16 %v1082, %v1082
        %v1191 = vpack.c.bf16 %v1097, %v1097
        %v1192 = vpack.c.bf16 %v1099, %v1099
        %v1195 = vunpack.c.l.b16 %v1177
        %v1196 = vunpack.c.l.b16 %v1178
        %v1197 = vpack.c.b16 %v1196, %v1195
        %v1200 = vunpack.c.l.b16 %v1185
        %v1201 = vunpack.c.l.b16 %v1186
        %v1202 = vpack.c.b16 %v1201, %v1200
        %v1204 = vsel %vm952, %v1197, 0
        %v1207 = vsel %vm952, %v1202, 0
        %1209 = vmatpush.bf16.xpose.msra.mxu0 0
        %1210 = vmatpush.bf16.xpose.msra.mxu0 0
        %1211 = vmatpush.bf16.xpose.msra.mxu0 0
        %1212 = vmatpush.bf16.xpose.msra.mxu0 0
        %1213 = vmatpush.bf16.xpose.msra.mxu0 0
        %1214 = vmatpush.bf16.xpose.msra.mxu0 0
        %1215 = vmatpush.bf16.xpose.msra.mxu0 0
        %1216 = vmatpush.bf16.xpose.msra.mxu0 %v1207
        %1217 = vmatmul.bf16.gmra.mxu0 %v1204
        %v1218 = vpop.f32.mrf.mxu0
        %v1219 = vadd.f32 0.0, %v1218
        %v1220 = vpop.f32.mrf.mxu0
        %v1221 = vadd.f32 0.0, %v1220
        %1222 = vdwg.mxu0
        %v1225 = vunpack.c.l.b16 %v1179
        %v1226 = vunpack.c.l.b16 %v1180
        %v1227 = vpack.c.b16 %v1226, %v1225
        %v1230 = vunpack.c.l.b16 %v1187
        %v1231 = vunpack.c.l.b16 %v1188
        %v1232 = vpack.c.b16 %v1231, %v1230
        %v1234 = vsel %vm952, %v1227, 0
        %v1237 = vsel %vm952, %v1232, 0
        %1239 = vmatpush.bf16.xpose.msra.mxu0 0
        %1240 = vmatpush.bf16.xpose.msra.mxu0 0
        %1241 = vmatpush.bf16.xpose.msra.mxu0 0
        %1242 = vmatpush.bf16.xpose.msra.mxu0 0
        %1243 = vmatpush.bf16.xpose.msra.mxu0 0
        %1244 = vmatpush.bf16.xpose.msra.mxu0 0
        %1245 = vmatpush.bf16.xpose.msra.mxu0 0
        %1246 = vmatpush.bf16.xpose.msra.mxu0 %v1237
        %1247 = vmatmul.bf16.gmra.mxu0 %v1234
        %v1248 = vpop.f32.mrf.mxu0
        %v1249 = vadd.f32 0.0, %v1248
        %v1250 = vpop.f32.mrf.mxu0
        %v1251 = vadd.f32 0.0, %v1250
        %1252 = vdwg.mxu0
        %v1255 = vunpack.c.l.b16 %v1181
        %v1256 = vunpack.c.l.b16 %v1182
        %v1257 = vpack.c.b16 %v1256, %v1255
        %v1260 = vunpack.c.l.b16 %v1189
        %v1261 = vunpack.c.l.b16 %v1190
        %v1262 = vpack.c.b16 %v1261, %v1260
        %v1264 = vsel %vm952, %v1257, 0
        %v1267 = vsel %vm952, %v1262, 0
        %1269 = vmatpush.bf16.xpose.msra.mxu0 0
        %1270 = vmatpush.bf16.xpose.msra.mxu0 0
        %1271 = vmatpush.bf16.xpose.msra.mxu0 0
        %1272 = vmatpush.bf16.xpose.msra.mxu0 0
        %1273 = vmatpush.bf16.xpose.msra.mxu0 0
        %1274 = vmatpush.bf16.xpose.msra.mxu0 0
        %1275 = vmatpush.bf16.xpose.msra.mxu0 0
        %1276 = vmatpush.bf16.xpose.msra.mxu0 %v1267
        %1277 = vmatmul.bf16.gmra.mxu0 %v1264
        %v1278 = vpop.f32.mrf.mxu0
        %v1279 = vadd.f32 0.0, %v1278
        %v1280 = vpop.f32.mrf.mxu0
        %v1281 = vadd.f32 0.0, %v1280
        %1282 = vdwg.mxu0
        %v1285 = vunpack.c.l.b16 %v1183
        %v1286 = vunpack.c.l.b16 %v1184
        %v1287 = vpack.c.b16 %v1286, %v1285
        %v1290 = vunpack.c.l.b16 %v1191
        %v1291 = vunpack.c.l.b16 %v1192
        %v1292 = vpack.c.b16 %v1291, %v1290
        %v1294 = vsel %vm952, %v1287, 0
        %v1297 = vsel %vm952, %v1292, 0
        %1299 = vmatpush.bf16.xpose.msra.mxu0 0
        %1300 = vmatpush.bf16.xpose.msra.mxu0 0
        %1301 = vmatpush.bf16.xpose.msra.mxu0 0
        %1302 = vmatpush.bf16.xpose.msra.mxu0 0
        %1303 = vmatpush.bf16.xpose.msra.mxu0 0
        %1304 = vmatpush.bf16.xpose.msra.mxu0 0
        %1305 = vmatpush.bf16.xpose.msra.mxu0 0
        %1306 = vmatpush.bf16.xpose.msra.mxu0 %v1297
        %1307 = vmatmul.bf16.gmra.mxu0 %v1294
        %v1308 = vpop.f32.mrf.mxu0
        %v1309 = vadd.f32 0.0, %v1308
        %v1310 = vpop.f32.mrf.mxu0
        %v1311 = vadd.f32 0.0, %v1310
        %1312 = vdwg.mxu0
        %vm1313 = vcmask 130048
        %v1314 = vsel %vm1313, %v1219, -inf
        %1315 = vmax.xlane.f32.xlu0 %v1314
        %v1316 = vpop.xlane.xlu0 %1315
        %v1317 = vsel %vm1313, %v1221, -inf
        %1318 = vmax.xlane.f32.xlu0 %v1317
        %v1319 = vpop.xlane.xlu0 %1318
        %v1320 = vsel %vm1313, %v1249, -inf
        %1321 = vmax.xlane.f32.xlu0 %v1320
        %v1322 = vpop.xlane.xlu0 %1321
        %v1323 = vsel %vm1313, %v1251, -inf
        %1324 = vmax.xlane.f32.xlu0 %v1323
        %v1325 = vpop.xlane.xlu0 %1324
        %v1326 = vsel %vm1313, %v1279, -inf
        %1327 = vmax.xlane.f32.xlu0 %v1326
        %v1328 = vpop.xlane.xlu0 %1327
        %v1329 = vsel %vm1313, %v1281, -inf
        %1330 = vmax.xlane.f32.xlu0 %v1329
        %v1331 = vpop.xlane.xlu0 %1330
        %v1332 = vsel %vm1313, %v1309, -inf
        %1333 = vmax.xlane.f32.xlu0 %v1332
        %v1334 = vpop.xlane.xlu0 %1333
        %v1335 = vsel %vm1313, %v1311, -inf
        %1336 = vmax.xlane.f32.xlu0 %v1335
        %v1337 = vpop.xlane.xlu0 %1336
        %v1338 = vsub.f32 %v1219, %v1316
        %v1339 = vsub.f32 %v1221, %v1319
        %v1340 = vsub.f32 %v1249, %v1322
        %v1341 = vsub.f32 %v1251, %v1325
        %v1342 = vsub.f32 %v1279, %v1328
        %v1343 = vsub.f32 %v1281, %v1331
        %v1344 = vsub.f32 %v1309, %v1334
        %v1345 = vsub.f32 %v1311, %v1337
        %v1346 = vmul.f32 %v1338, 1.442695
        %v1347 = vpow.pop %v1346
        %v1348 = vmul.f32 %v1339, 1.442695
        %v1349 = vpow.pop %v1348
        %v1350 = vmul.f32 %v1340, 1.442695
        %v1351 = vpow.pop %v1350
        %v1352 = vmul.f32 %v1341, 1.442695
        %v1353 = vpow.pop %v1352
        %v1354 = vmul.f32 %v1342, 1.442695
        %v1355 = vpow.pop %v1354
        %v1356 = vmul.f32 %v1343, 1.442695
        %v1357 = vpow.pop %v1356
        %v1358 = vmul.f32 %v1344, 1.442695
        %v1359 = vpow.pop %v1358
        %v1360 = vmul.f32 %v1345, 1.442695
        %v1361 = vpow.pop %v1360
        %v1362 = vsel %vm1313, %v1347, 0.0
        %1363 = vadd.xlane.f32.xlu0 %v1362
        %v1364 = vpop.xlane.xlu0 %1363
        %v1365 = vsel %vm1313, %v1349, 0.0
        %1366 = vadd.xlane.f32.xlu0 %v1365
        %v1367 = vpop.xlane.xlu0 %1366
        %v1368 = vsel %vm1313, %v1351, 0.0
        %1369 = vadd.xlane.f32.xlu0 %v1368
        %v1370 = vpop.xlane.xlu0 %1369
        %v1371 = vsel %vm1313, %v1353, 0.0
        %1372 = vadd.xlane.f32.xlu0 %v1371
        %v1373 = vpop.xlane.xlu0 %1372
        %v1374 = vsel %vm1313, %v1355, 0.0
        %1375 = vadd.xlane.f32.xlu0 %v1374
        %v1376 = vpop.xlane.xlu0 %1375
        %v1377 = vsel %vm1313, %v1357, 0.0
        %1378 = vadd.xlane.f32.xlu0 %v1377
        %v1379 = vpop.xlane.xlu0 %1378
        %v1380 = vsel %vm1313, %v1359, 0.0
        %1381 = vadd.xlane.f32.xlu0 %v1380
        %v1382 = vpop.xlane.xlu0 %1381
        %v1383 = vsel %vm1313, %v1361, 0.0
        %1384 = vadd.xlane.f32.xlu0 %v1383
        %v1385 = vpop.xlane.xlu0 %1384
        %v1386 = vrcp.pop %v1364
        %v1387 = vrcp.pop %v1367
        %v1388 = vrcp.pop %v1370
        %v1389 = vrcp.pop %v1373
        %v1390 = vrcp.pop %v1376
        %v1391 = vrcp.pop %v1379
        %v1392 = vrcp.pop %v1382
        %v1393 = vrcp.pop %v1385
        %v1394 = vmul.f32 %v1347, %v1386
        %v1395 = vmul.f32 %v1349, %v1387
        %v1396 = vmul.f32 %v1351, %v1388
        %v1397 = vmul.f32 %v1353, %v1389
        %v1398 = vmul.f32 %v1355, %v1390
        %v1399 = vmul.f32 %v1357, %v1391
        %v1400 = vmul.f32 %v1359, %v1392
        %v1401 = vmul.f32 %v1361, %v1393
        %v1402 = vpack.c.bf16 %v1394, %v1394
        %v1403 = vpack.c.bf16 %v1395, %v1395
        %v1404 = vpack.c.bf16 %v1396, %v1396
        %v1405 = vpack.c.bf16 %v1397, %v1397
        %v1406 = vpack.c.bf16 %v1398, %v1398
        %v1407 = vpack.c.bf16 %v1399, %v1399
        %v1408 = vpack.c.bf16 %v1400, %v1400
        %v1409 = vpack.c.bf16 %v1401, %v1401
        %v1410 = vpack.c.bf16 %v1122, %v1122
        %v1411 = vpack.c.bf16 %v1124, %v1124
        %v1412 = vpack.c.bf16 %v1139, %v1139
        %v1413 = vpack.c.bf16 %v1141, %v1141
        %v1414 = vpack.c.bf16 %v1156, %v1156
        %v1415 = vpack.c.bf16 %v1158, %v1158
        %v1416 = vpack.c.bf16 %v1173, %v1173
        %v1417 = vpack.c.bf16 %v1175, %v1175
        %v1420 = vunpack.c.l.b16 %v1402
        %v1421 = vunpack.c.l.b16 %v1403
        %v1422 = vpack.c.b16 %v1421, %v1420
        %v1425 = vunpack.c.l.b16 %v1410
        %v1426 = vunpack.c.l.b16 %v1411
        %v1427 = vpack.c.b16 %v1426, %v1425
        %v1430 = vsel %vm1313, %v1422, 0
        %1432 = vmatpush.bf16.msra.mxu0 0
        %1433 = vmatpush.bf16.msra.mxu0 0
        %1434 = vmatpush.bf16.msra.mxu0 0
        %1435 = vmatpush.bf16.msra.mxu0 0
        %1436 = vmatpush.bf16.msra.mxu0 0
        %1437 = vmatpush.bf16.msra.mxu0 0
        %1438 = vmatpush.bf16.msra.mxu0 0
        %1439 = vmatpush.bf16.msra.mxu0 %v1427
        %1440 = vmatmul.bf16.gmra.mxu0 %v1430
        %v1441 = vpop.f32.mrf.mxu0
        %v1442 = vadd.f32 0.0, %v1441
        %v1443 = vpop.f32.mrf.mxu0
        %v1444 = vadd.f32 0.0, %v1443
        %1445 = vdwg.mxu0
        %v1448 = vunpack.c.l.b16 %v1404
        %v1449 = vunpack.c.l.b16 %v1405
        %v1450 = vpack.c.b16 %v1449, %v1448
        %v1453 = vunpack.c.l.b16 %v1412
        %v1454 = vunpack.c.l.b16 %v1413
        %v1455 = vpack.c.b16 %v1454, %v1453
        %v1458 = vsel %vm1313, %v1450, 0
        %1460 = vmatpush.bf16.msra.mxu0 0
        %1461 = vmatpush.bf16.msra.mxu0 0
        %1462 = vmatpush.bf16.msra.mxu0 0
        %1463 = vmatpush.bf16.msra.mxu0 0
        %1464 = vmatpush.bf16.msra.mxu0 0
        %1465 = vmatpush.bf16.msra.mxu0 0
        %1466 = vmatpush.bf16.msra.mxu0 0
        %1467 = vmatpush.bf16.msra.mxu0 %v1455
        %1468 = vmatmul.bf16.gmra.mxu0 %v1458
        %v1469 = vpop.f32.mrf.mxu0
        %v1470 = vadd.f32 0.0, %v1469
        %v1471 = vpop.f32.mrf.mxu0
        %v1472 = vadd.f32 0.0, %v1471
        %1473 = vdwg.mxu0
        %v1476 = vunpack.c.l.b16 %v1406
        %v1477 = vunpack.c.l.b16 %v1407
        %v1478 = vpack.c.b16 %v1477, %v1476
        %v1481 = vunpack.c.l.b16 %v1414
        %v1482 = vunpack.c.l.b16 %v1415
        %v1483 = vpack.c.b16 %v1482, %v1481
        %v1486 = vsel %vm1313, %v1478, 0
        %1488 = vmatpush.bf16.msra.mxu0 0
        %1489 = vmatpush.bf16.msra.mxu0 0
        %1490 = vmatpush.bf16.msra.mxu0 0
        %1491 = vmatpush.bf16.msra.mxu0 0
        %1492 = vmatpush.bf16.msra.mxu0 0
        %1493 = vmatpush.bf16.msra.mxu0 0
        %1494 = vmatpush.bf16.msra.mxu0 0
        %1495 = vmatpush.bf16.msra.mxu0 %v1483
        %1496 = vmatmul.bf16.gmra.mxu0 %v1486
        %v1497 = vpop.f32.mrf.mxu0
        %v1498 = vadd.f32 0.0, %v1497
        %v1499 = vpop.f32.mrf.mxu0
        %v1500 = vadd.f32 0.0, %v1499
        %1501 = vdwg.mxu0
        %v1504 = vunpack.c.l.b16 %v1408
        %v1505 = vunpack.c.l.b16 %v1409
        %v1506 = vpack.c.b16 %v1505, %v1504
        %v1509 = vunpack.c.l.b16 %v1416
        %v1510 = vunpack.c.l.b16 %v1417
        %v1511 = vpack.c.b16 %v1510, %v1509
        %v1514 = vsel %vm1313, %v1506, 0
        %1516 = vmatpush.bf16.msra.mxu0 0
        %1517 = vmatpush.bf16.msra.mxu0 0
        %1518 = vmatpush.bf16.msra.mxu0 0
        %1519 = vmatpush.bf16.msra.mxu0 0
        %1520 = vmatpush.bf16.msra.mxu0 0
        %1521 = vmatpush.bf16.msra.mxu0 0
        %1522 = vmatpush.bf16.msra.mxu0 0
        %1523 = vmatpush.bf16.msra.mxu0 %v1511
        %1524 = vmatmul.bf16.gmra.mxu0 %v1514
        %v1525 = vpop.f32.mrf.mxu0
        %v1526 = vadd.f32 0.0, %v1525
        %v1527 = vpop.f32.mrf.mxu0
        %v1528 = vadd.f32 0.0, %v1527
        %1529 = vdwg.mxu0
        %v1530 = vpack.c.bf16 %v1442, %v1442
        %v1531 = vpack.c.bf16 %v1444, %v1444
        %v1532 = vpack.c.bf16 %v1470, %v1470
        %v1533 = vpack.c.bf16 %v1472, %v1472
        %v1534 = vpack.c.bf16 %v1498, %v1498
        %v1535 = vpack.c.bf16 %v1500, %v1500
        %v1536 = vpack.c.bf16 %v1526, %v1526
        %v1537 = vpack.c.bf16 %v1528, %v1528
        %v1538 = vld [vmem:[%s676] sm:$0xf]
        %v1539 = vld [vmem:[%s676 + $0x4] sm:$0xf]
        %v1540 = vld [vmem:[%s676 + $0x8] sm:$0xf]
        %v1541 = vld [vmem:[%s676 + $0xc] sm:$0xf]
        %v1544 = vunpack.c.l.b16 %v1530
        %v1545 = vunpack.c.l.b16 %v1531
        %v1546 = vpack.c.b16 %v1545, %v1544
        %v1548 = vsel %vm952, %v1546, 0
        %v1551 = vsel %vm956, %v1538, 0
        %1553 = vmatpush.bf16.msra.mxu0 0
        %1554 = vmatpush.bf16.msra.mxu0 0
        %1555 = vmatpush.bf16.msra.mxu0 0
        %1556 = vmatpush.bf16.msra.mxu0 0
        %1557 = vmatpush.bf16.msra.mxu0 0
        %1558 = vmatpush.bf16.msra.mxu0 0
        %1559 = vmatpush.bf16.msra.mxu0 0
        %1560 = vmatpush.bf16.msra.mxu0 %v1551
        %1561 = vmatmul.bf16.gmra.mxu0 %v1548
        %v1562 = vpop.f32.mrf.mxu0
        %v1563 = vadd.f32 0.0, %v1562
        %v1564 = vpop.f32.mrf.mxu0
        %v1565 = vadd.f32 0.0, %v1564
        %1566 = vdwg.mxu0
        %v1569 = vunpack.c.l.b16 %v1532
        %v1570 = vunpack.c.l.b16 %v1533
        %v1571 = vpack.c.b16 %v1570, %v1569
        %v1573 = vsel %vm952, %v1571, 0
        %v1576 = vsel %vm956, %v1539, 0
        %1578 = vmatpush.bf16.msra.mxu0 0
        %1579 = vmatpush.bf16.msra.mxu0 0
        %1580 = vmatpush.bf16.msra.mxu0 0
        %1581 = vmatpush.bf16.msra.mxu0 0
        %1582 = vmatpush.bf16.msra.mxu0 0
        %1583 = vmatpush.bf16.msra.mxu0 0
        %1584 = vmatpush.bf16.msra.mxu0 0
        %1585 = vmatpush.bf16.msra.mxu0 %v1576
        %1586 = vmatmul.bf16.gmra.mxu0 %v1573
        %v1587 = vpop.f32.mrf.mxu0
        %v1588 = vadd.f32 0.0, %v1587
        %v1589 = vpop.f32.mrf.mxu0
        %v1590 = vadd.f32 0.0, %v1589
        %1591 = vdwg.mxu0
        %v1594 = vunpack.c.l.b16 %v1534
        %v1595 = vunpack.c.l.b16 %v1535
        %v1596 = vpack.c.b16 %v1595, %v1594
        %v1598 = vsel %vm952, %v1596, 0
        %v1601 = vsel %vm956, %v1540, 0
        %1603 = vmatpush.bf16.msra.mxu0 0
        %1604 = vmatpush.bf16.msra.mxu0 0
        %1605 = vmatpush.bf16.msra.mxu0 0
        %1606 = vmatpush.bf16.msra.mxu0 0
        %1607 = vmatpush.bf16.msra.mxu0 0
        %1608 = vmatpush.bf16.msra.mxu0 0
        %1609 = vmatpush.bf16.msra.mxu0 0
        %1610 = vmatpush.bf16.msra.mxu0 %v1601
        %1611 = vmatmul.bf16.gmra.mxu0 %v1598
        %v1612 = vpop.f32.mrf.mxu0
        %v1613 = vadd.f32 0.0, %v1612
        %v1614 = vpop.f32.mrf.mxu0
        %v1615 = vadd.f32 0.0, %v1614
        %1616 = vdwg.mxu0
        %v1619 = vunpack.c.l.b16 %v1536
        %v1620 = vunpack.c.l.b16 %v1537
        %v1621 = vpack.c.b16 %v1620, %v1619
        %v1623 = vsel %vm952, %v1621, 0
        %v1626 = vsel %vm956, %v1541, 0
        %1628 = vmatpush.bf16.msra.mxu0 0
        %1629 = vmatpush.bf16.msra.mxu0 0
        %1630 = vmatpush.bf16.msra.mxu0 0
        %1631 = vmatpush.bf16.msra.mxu0 0
        %1632 = vmatpush.bf16.msra.mxu0 0
        %1633 = vmatpush.bf16.msra.mxu0 0
        %1634 = vmatpush.bf16.msra.mxu0 0
        %1635 = vmatpush.bf16.msra.mxu0 %v1626
        %1636 = vmatmul.bf16.gmra.mxu0 %v1623
        %v1637 = vpop.f32.mrf.mxu0
        %v1638 = vadd.f32 0.0, %v1637
        %v1639 = vpop.f32.mrf.mxu0
        %v1640 = vadd.f32 0.0, %v1639
        %1641 = vdwg.mxu0
        %v1642 = vsel %vm783, %v1563, 0.0
        %v1643 = vsel %vm783, %v1588, 0.0
        %v1644 = vadd.f32 %v1642, %v1643
        %v1645 = vsel %vm783, %v1613, 0.0
        %v1646 = vadd.f32 %v1644, %v1645
        %v1647 = vsel %vm783, %v1638, 0.0
        %v1648 = vadd.f32 %v1646, %v1647
        %v1649 = vsel %vm783, %v1565, 0.0
        %v1650 = vsel %vm783, %v1590, 0.0
        %v1651 = vadd.f32 %v1649, %v1650
        %v1652 = vsel %vm783, %v1615, 0.0
        %v1653 = vadd.f32 %v1651, %v1652
        %v1654 = vsel %vm783, %v1640, 0.0
        %v1655 = vadd.f32 %v1653, %v1654
        %v1656 = vadd.f32 %v768, %v1648
        %v1657 = vadd.f32 %v769, %v1655
        %v1658 = vld [vmem:[%s698] sm:$0xf]
        %v1659 = vsel %vm783, %v1656, 0.0
        %1660 = vadd.xlane.f32.xlu0 %v1659
        %v1661 = vpop.xlane.xlu0 %1660
        %v1662 = vsel %vm783, %v1657, 0.0
        %1663 = vadd.xlane.f32.xlu0 %v1662
        %v1664 = vpop.xlane.xlu0 %1663
        %v1665 = vmul.f32 %v1661, %v796
        %v1666 = vmul.f32 %v1664, %v796
        %v1667 = vsub.f32 %v1656, %v1665
        %v1668 = vsub.f32 %v1657, %v1666
        %v1669 = vmul.f32 %v1667, %v1667
        %v1670 = vmul.f32 %v1668, %v1668
        %v1671 = vsel %vm783, %v1669, 0.0
        %1672 = vadd.xlane.f32.xlu0 %v1671
        %v1673 = vpop.xlane.xlu0 %1672
        %v1674 = vsel %vm783, %v1670, 0.0
        %1675 = vadd.xlane.f32.xlu0 %v1674
        %v1676 = vpop.xlane.xlu0 %1675
        %v1677 = vmul.f32 %v1673, %v796
        %v1678 = vmul.f32 %v1676, %v796
        %v1679 = vadd.f32 %v1677, 1e-05
        %v1680 = vadd.f32 %v1678, 1e-05
        %v1681 = vrsqrt.pop %v1679
        %v1682 = vmul.f32 %v1681, %v1679
        %v1683 = vmul.f32 %v1682, %v1681
        %v1684 = vmul.f32 0.5, %v1683
        %v1685 = vsub.f32 1.5, %v1684
        %v1686 = vmul.f32 %v1681, %v1685
        %vm1687 = vweird.f32 %v1679
        %vm1688 = vweird.f32 %v1681
        %vm1689 = vmor %vm1687, %vm1688
        %v1690 = vsel %vm1689, %v1681, %v1686
        %v1691 = vrsqrt.pop %v1680
        %v1692 = vmul.f32 %v1691, %v1680
        %v1693 = vmul.f32 %v1692, %v1691
        %v1694 = vmul.f32 0.5, %v1693
        %v1695 = vsub.f32 1.5, %v1694
        %v1696 = vmul.f32 %v1691, %v1695
        %vm1697 = vweird.f32 %v1680
        %vm1698 = vweird.f32 %v1691
        %vm1699 = vmor %vm1697, %vm1698
        %v1700 = vsel %vm1699, %v1691, %v1696
        %v1701 = vmul.f32 %v1667, %v1690
        %v1702 = vmul.f32 %v1668, %v1700
        %v1703 = vperm.slane %v782, 2
        %v1704 = vmul.f32 %v1701, %v1703
        %v1705 = vmul.f32 %v1702, %v1703
        %v1706 = vperm.slane %v782, 3
        %v1707 = vadd.f32 %v1704, %v1706
        %v1708 = vadd.f32 %v1705, %v1706
        %v1709 = vpack.c.bf16 %v1708, %v1707
        %v1710 = vld [vmem:[%s681] sm:$0xf]
        %v1711 = vld [vmem:[%s681 + $0x4] sm:$0xf]
        %v1712 = vld [vmem:[%s681 + $0x8] sm:$0xf]
        %v1713 = vld [vmem:[%s681 + $0xc] sm:$0xf]
        %v1714 = vperm.slane %v1658, 0
        %v1719 = vunpack.c.l.b16 %v1710
        %v1720 = vunpack.c.l.b16 %v1711
        %v1721 = vunpack.c.l.b16 %v1712
        %v1722 = vunpack.c.l.b16 %v1713
        %v1723 = vpack.c.b16 %v1720, %v1719
        %v1724 = vpack.c.b16 %v1722, %v1721
        %v1728 = vsel %vm783, %v1709, 0
        %1730 = vmatpush.bf16.msra.mxu0 0
        %1731 = vmatpush.bf16.msra.mxu0 0
        %1732 = vmatpush.bf16.msra.mxu0 0
        %1733 = vmatpush.bf16.msra.mxu0 0
        %1734 = vmatpush.bf16.msra.mxu0 0
        %1735 = vmatpush.bf16.msra.mxu0 0
        %1736 = vmatpush.bf16.msra.mxu0 %v1724
        %1737 = vmatpush.bf16.msra.mxu0 %v1723
        %1738 = vmatmul.bf16.gmra.mxu0 %v1728
        %v1739 = vpop.f32.mrf.mxu0
        %v1740 = vadd.f32 %v1714, %v1739
        %v1741 = vpop.f32.mrf.mxu0
        %v1742 = vadd.f32 %v1714, %v1741
        %1743 = vdwg.mxu0
        %v1744 = vpack.c.bf16 %v1742, %v1740
        %v1745 = vld [vmem:[%s685] sm:$0xf]
        %v1746 = vperm.slane %v1658, 1
        %v1748 = vsel %vm952, %v1744, 0
        %v1751 = vsel %vm956, %v1745, 0
        %1753 = vmatpush.bf16.msra.mxu0 0
        %1754 = vmatpush.bf16.msra.mxu0 0
        %1755 = vmatpush.bf16.msra.mxu0 0
        %1756 = vmatpush.bf16.msra.mxu0 0
        %1757 = vmatpush.bf16.msra.mxu0 0
        %1758 = vmatpush.bf16.msra.mxu0 0
        %1759 = vmatpush.bf16.msra.mxu0 0
        %1760 = vmatpush.bf16.msra.mxu0 %v1751
        %1761 = vmatmul.bf16.gmra.mxu0 %v1748
        %v1762 = vpop.f32.mrf.mxu0
        %v1763 = vadd.f32 %v1746, %v1762
        %v1764 = vpop.f32.mrf.mxu0
        %v1765 = vadd.f32 %v1746, %v1764
        %1766 = vdwg.mxu0
        %v1767 = vmul.f32 %v1763, 0.5
        %v1768 = vmul.f32 %v1765, 0.5
        %v1769 = vmul.f32 %v1763, 0.044715
        %v1770 = vmul.f32 %v1765, 0.044715
        %v1771 = vmul.f32 %v1769, %v1763
        %v1772 = vmul.f32 %v1770, %v1765
        %v1773 = vmul.f32 %v1771, %v1763
        %v1774 = vmul.f32 %v1772, %v1765
        %v1775 = vadd.f32 %v1763, %v1773
        %v1776 = vadd.f32 %v1765, %v1774
        %v1777 = vmul.f32 %v1775, 0.7978846
        %v1778 = vmul.f32 %v1776, 0.7978846
        %v1779 = vtanh.pop %v1777
        %v1780 = vtanh.pop %v1778
        %v1781 = vadd.f32 %v1779, 1.0
        %v1782 = vadd.f32 %v1780, 1.0
        %v1783 = vmul.f32 %v1767, %v1781
        %v1784 = vmul.f32 %v1768, %v1782
        %v1785 = vpack.c.bf16 %v1784, %v1783
        %v1786 = vld [vmem:[%s690] sm:$0xf]
        %v1787 = vld [vmem:[%s690 + $0x4] sm:$0xf]
        %v1788 = vld [vmem:[%s690 + $0x8] sm:$0xf]
        %v1789 = vld [vmem:[%s690 + $0xc] sm:$0xf]
        %v1790 = vld [vmem:[%s690 + $0x10] sm:$0xf]
        %v1791 = vld [vmem:[%s690 + $0x14] sm:$0xf]
        %v1792 = vld [vmem:[%s690 + $0x18] sm:$0xf]
        %v1793 = vld [vmem:[%s690 + $0x1c] sm:$0xf]
        %v1794 = vperm.slane %v1658, 2
        %v1803 = vunpack.c.l.b16 %v1786
        %v1804 = vunpack.c.l.b16 %v1787
        %v1805 = vunpack.c.l.b16 %v1788
        %v1806 = vunpack.c.l.b16 %v1789
        %v1807 = vunpack.c.l.b16 %v1790
        %v1808 = vunpack.c.l.b16 %v1791
        %v1809 = vunpack.c.l.b16 %v1792
        %v1810 = vunpack.c.l.b16 %v1793
        %v1811 = vpack.c.b16 %v1804, %v1803
        %v1812 = vpack.c.b16 %v1806, %v1805
        %v1813 = vpack.c.b16 %v1808, %v1807
        %v1814 = vpack.c.b16 %v1810, %v1809
        %vm1819 = vcmask 523264
        %v1821 = vsel %vm1819, %v1785, 0
        %1823 = vmatpush.bf16.msra.mxu0 0
        %1824 = vmatpush.bf16.msra.mxu0 0
        %1825 = vmatpush.bf16.msra.mxu0 0
        %1826 = vmatpush.bf16.msra.mxu0 0
        %1827 = vmatpush.bf16.msra.mxu0 %v1814
        %1828 = vmatpush.bf16.msra.mxu0 %v1813
        %1829 = vmatpush.bf16.msra.mxu0 %v1812
        %1830 = vmatpush.bf16.msra.mxu0 %v1811
        %1831 = vmatmul.bf16.gmra.mxu0 %v1821
        %v1832 = vpop.f32.mrf.mxu0
        %v1833 = vadd.f32 %v1794, %v1832
        %v1834 = vpop.f32.mrf.mxu0
        %v1835 = vadd.f32 %v1794, %v1834
        %1836 = vdwg.mxu0
        %v1837 = vpack.c.bf16 %v1835, %v1833
        %v1838 = vld [vmem:[%s694] sm:$0xf]
        %v1839 = vperm.slane %v1658, 3
        %v1841 = vsel %vm952, %v1837, 0
        %v1844 = vsel %vm956, %v1838, 0
        %1846 = vmatpush.bf16.msra.mxu0 0
        %1847 = vmatpush.bf16.msra.mxu0 0
        %1848 = vmatpush.bf16.msra.mxu0 0
        %1849 = vmatpush.bf16.msra.mxu0 0
        %1850 = vmatpush.bf16.msra.mxu0 0
        %1851 = vmatpush.bf16.msra.mxu0 0
        %1852 = vmatpush.bf16.msra.mxu0 0
        %1853 = vmatpush.bf16.msra.mxu0 %v1844
        %1854 = vmatmul.bf16.gmra.mxu0 %v1841
        %v1855 = vpop.f32.mrf.mxu0
        %v1856 = vadd.f32 %v1839, %v1855
        %v1857 = vpop.f32.mrf.mxu0
        %v1858 = vadd.f32 %v1839, %v1857
        %1859 = vdwg.mxu0
        %v1860 = vadd.f32 %v1656, %v1856
        %v1861 = vadd.f32 %v1657, %v1858
        %1862 = vst.msk [vmem:[#allocation2] sm:$0xff] %vm783, %v1860
        %1863 = vst.msk [vmem:[#allocation2 + $0x8] sm:$0xff] %vm783, %v1861
        %p1864 = scmp.eq.s32.totalorder %s35, 1
        // Predicated region
        $region89: #{vit_factorized_forward.1} parent=83 // pred_check
          %p1865 = pneg %p1864
        $region90: #{vit_factorized_forward.1} parent=83 // pred_check_branch
          %1867 = sbr.rel (%p1865) target = $region92
        $region91: #{vit_factorized_forward.1} parent=83 // pred_region
          %v1868 = vld [vmem:[%s13] sm:$0x3]
          %vm1869 = vcmask 253952
          %v1870 = vsel %vm1869, %v1860, 0.0
          %1871 = vadd.xlane.f32.xlu0 %v1870
          %v1872 = vpop.xlane.xlu0 %1871
          %v1873 = vmul.f32 %v1872, %v796
          %v1874 = vsub.f32 %v1860, %v1873
          %v1875 = vmul.f32 %v1874, %v1874
          %v1876 = vsel %vm1869, %v1875, 0.0
          %1877 = vadd.xlane.f32.xlu0 %v1876
          %v1878 = vpop.xlane.xlu0 %1877
          %v1879 = vmul.f32 %v1878, %v796
          %v1880 = vadd.f32 %v1879, 1e-05
          %v1881 = vrsqrt.pop %v1880
          %v1882 = vmul.f32 %v1881, %v1880
          %v1883 = vmul.f32 %v1882, %v1881
          %v1884 = vmul.f32 0.5, %v1883
          %v1885 = vsub.f32 1.5, %v1884
          %v1886 = vmul.f32 %v1881, %v1885
          %vm1887 = vweird.f32 %v1880
          %vm1888 = vweird.f32 %v1881
          %vm1889 = vmor %vm1887, %vm1888
          %v1890 = vsel %vm1889, %v1881, %v1886
          %v1891 = vmul.f32 %v1874, %v1890
          %v1892 = vmul.f32 %v1891, %v1868
          %v1894 = vrot.slane %v1868, 1
          %v1896 = vadd.f32 %v1892, %v1894
          %v1897 = vpack.c.bf16 %v1896, %v1896
          %v1898 = vld [vmem:[%s14] sm:$0xf]
          %v1899 = vld [vmem:[%s14 + $0x4] sm:$0xf]
          %v1900 = vld [vmem:[%s14 + $0x8] sm:$0xf]
          %v1901 = vld [vmem:[%s14 + $0xc] sm:$0xf]
          %v1902 = vld [vmem:[%s15] sm:$0x1]
          %v1907 = vunpack.c.l.b16 %v1898
          %v1908 = vunpack.c.l.b16 %v1899
          %v1909 = vunpack.c.l.b16 %v1900
          %v1910 = vunpack.c.l.b16 %v1901
          %v1911 = vpack.c.b16 %v1908, %v1907
          %v1912 = vpack.c.b16 %v1910, %v1909
          %v1916 = vsel %vm783, %v1897, 0
          %1918 = vmatpush.bf16.msra.mxu0 0
          %1919 = vmatpush.bf16.msra.mxu0 0
          %1920 = vmatpush.bf16.msra.mxu0 0
          %1921 = vmatpush.bf16.msra.mxu0 0
          %1922 = vmatpush.bf16.msra.mxu0 0
          %1923 = vmatpush.bf16.msra.mxu0 0
          %1924 = vmatpush.bf16.msra.mxu0 %v1912
          %1925 = vmatpush.bf16.msra.mxu0 %v1911
          %1926 = vmatmul.bf16.gmra.mxu0 %v1916
          %v1927 = vpop.f32.mrf.mxu0
          %v1928 = vadd.f32 %v1902, %v1927
          %v1929 = vpop.f32.mrf.mxu0
          %1930 = vdwg.mxu0
          %vm1931 = vcmask 73728
          %1932 = vst.msk [vmem:[%s652] sm:$0x1] %vm1931, %v1928
        $region92: #{vit_factorized_forward.1} parent=83 // pred_fallthru
          _
        %s1933 = sand.u32 %s436, 1
        %s1934 = scalar_lea.sflag [#allocation4], %s1933
        %s1935 = sand.u32 %s436, 1
        %s1936 = scalar_lea.vmem [#allocation3], %s1935
        // Predicated region
        $region93: #{vit_factorized_forward.1} parent=83 // pred_check
          %p1937 = pneg %p446
        $region94: #{vit_factorized_forward.1} parent=83 // pred_check_branch
          %1939 = sbr.rel (%p1937) target = $region96
        $region95: #{vit_factorized_forward.1} parent=83 // pred_region
          %1941 = vsyncadd %s1934, 0
          %s1942 = scalar_lea.hbm %s16, %s34
          %s1944 = sshll.u32 %s1936, 4
          %s1945 = int_to_ptr.vmem [resolvable:$true] %s1944
          %s1946 = sshll.u32 %s1942, 4
          %s1947 = int_to_ptr.hbm [resolvable:$true] %s1946
          %1949 = dma.vmem_to_hbm [thread:$0]  %s1945, 16, %s1947, %s1934
        $region96: #{vit_factorized_forward.1} parent=83 // pred_fallthru
          _
      $region84: #{vit_factorized_forward.1} parent=5 // pred_fallthru
        _
      %p1950 = scmp.le.s32.totalorder 2, %s25
      // Predicated region
      $region97: #{vit_factorized_forward.1} parent=5 // pred_check
        %p1951 = pneg %p1950
      $region98: #{vit_factorized_forward.1} parent=5 // pred_check_branch
        %1953 = sbr.rel (%p1951) target = $region100
      $region99: #{vit_factorized_forward.1} parent=5 // pred_region
        %s1954 = ssub.s32 %s25, 2
        // Predicated region
        $region101: #{vit_factorized_forward.1} parent=99 // pred_check
          %p1955 = pneg %p452
        $region102: #{vit_factorized_forward.1} parent=99 // pred_check_branch
          %1957 = sbr.rel (%p1955) target = $region104
        $region103: #{vit_factorized_forward.1} parent=99 // pred_region
          %s1958 = sand.u32 %s437, 1
          %s1959 = scalar_lea.sflag [#allocation4], %s1958
          %s1960 = sand.u32 %s437, 1
          %s1961 = scalar_lea.vmem [#allocation3], %s1960
          %1963 = dma.done %s1959, 16
        $region104: #{vit_factorized_forward.1} parent=99 // pred_fallthru
          _
      $region100: #{vit_factorized_forward.1} parent=5 // pred_fallthru
        _
    $region6: #{vit_factorized_forward.1} parent=1 // loop_footer
      %s29 = sadd.s32 1, %s25
    $region7: #{vit_factorized_forward.1} parent=1 // loop_footer_branch
      %24 = sbr.rel target = $region3
    $region8: #{vit_factorized_forward.1} parent=1 // loop_exit
      _
    %1964 = vsyncpa [#allocation4], 1
    %s1965 = scalar_lea.sflag [#allocation4], 1
    %1966 = vsyncpa %s1965, 1

</llo_original>
